<compile_context>
chip_gen: v7x
topology: tpu7x:2x2x1
jax: 0.10.0
libtpu: 0.0.40
codegen_flags: <defaults>
</compile_context>

<pallas_src>
import jax
import jax.numpy as jnp
from jax.experimental import pallas as pl
from jax.experimental.pallas import tpu as pltpu

NEG_SLOPE = 0.01      # torch.nn.functional.leaky_relu default negative_slope
LANE = 128            # vreg lane width
ROW_ALIGN = 16        # bf16 packs 2 rows/sublane -> 16-row tiles keep vregs dense


def _leaky_relu(v):
    # max(v, a*v) == leaky_relu(v) for 0 < a < 1
    return jnp.maximum(v, NEG_SLOPE * v)


def _round_up(n, m):
    return ((n + m - 1) // m) * m


def mlp3_kernel(x_ref,
                w1_ref, b1_ref,
                w2_ref, b2_ref,
                w3_ref, b3_ref,
                w4_ref, b4_ref,
                o_ref):
    """Fused forward: 4 MXU matmuls (f32 accumulate) + bias + leaky_relu per layer."""
    wdt = w1_ref.dtype
    x = x_ref[...]
    h = _leaky_relu(
        jnp.dot(x, w1_ref[...], preferred_element_type=jnp.float32) + b1_ref[...])
    h = _leaky_relu(
        jnp.dot(h.astype(wdt), w2_ref[...], preferred_element_type=jnp.float32) + b2_ref[...])
    h = _leaky_relu(
        jnp.dot(h.astype(wdt), w3_ref[...], preferred_element_type=jnp.float32) + b3_ref[...])
    y = _leaky_relu(
        jnp.dot(h.astype(wdt), w4_ref[...], preferred_element_type=jnp.float32) + b4_ref[...])
    o_ref[...] = y.astype(o_ref.dtype)


def prepare_params(params, *, matmul_dtype=jnp.bfloat16, lane_align=LANE):
    """One-time weight/bias padding + casting (hoisted out of the forward path).

    params: dict of pre-transposed weights w1..w4 ([in, out]) and biases b1..b4 ([1, out]).
    lane_align: 128 (v5e-optimal / small dims); use 256 on v6e/v7x for hidden/outputs > 128.
    """
    f_in = params["w1"].shape[0]
    hidden = params["w1"].shape[1]
    f_out = params["w4"].shape[1]

    def align(d):
        return _round_up(d, lane_align if d > LANE else LANE)

    hid_p = align(hidden)
    out_p = align(f_out)

    def padw(a, rows, cols):
        return jnp.pad(a, ((0, rows - a.shape[0]), (0, cols - a.shape[1]))).astype(matmul_dtype)

    def padb(a, cols):
        return jnp.pad(a, ((0, 0), (0, cols - a.shape[1]))).astype(jnp.float32)

    prepped = dict(
        w1=padw(params["w1"], f_in, hid_p),     # K (input feature) rows kept UNPADDED
        w2=padw(params["w2"], hid_p, hid_p),
        w3=padw(params["w3"], hid_p, hid_p),
        w4=padw(params["w4"], hid_p, out_p),
        b1=padb(params["b1"], hid_p),
        b2=padb(params["b2"], hid_p),
        b3=padb(params["b3"], hid_p),
        b4=padb(params["b4"], out_p),
    )
    meta = dict(f_in=f_in, hidden=hidden, f_out=f_out,
                hid_p=hid_p, out_p=out_p, matmul_dtype=matmul_dtype)
    # TODO(synk): fp8 weight storage (v7x MXU-native) would halve weight bytes again; gated
    # per chip generation, not implemented here.
    return prepped, meta


def mlp3_forward(x, prepped, meta, *, block_rows=512, min_batch_tiles=1,
                 out_dtype=jnp.float32):
    """x: [B, inputs] float32.  prepped/meta from prepare_params().  Returns [B, outputs]."""
    B, f_in = x.shape
    assert f_in == meta["f_in"], "input feature dim mismatch"
    hid_p, out_p, f_out = meta["hid_p"], meta["out_p"], meta["f_out"]
    mm_dtype = meta["matmul_dtype"]

    # Row tiling: >=min_batch_tiles tiles (use 2 on v7x so the parallel axis spans both TCs),
    # <= block_rows rows per tile, rounded to 16 rows for dense bf16 sublane packing.
    block_rows = max(ROW_ALIGN, _round_up(block_rows, ROW_ALIGN))
    tiles = max(1, int(min_batch_tiles), -(-B // block_rows))
    tm = _round_up(-(-B // tiles), ROW_ALIGN)
    b_pad = _round_up(B, tm)

    # Per-call input prep: row-pad + cast ONLY x (weights were prepped once).
    x_p = x if b_pad == B else jnp.pad(x, ((0, b_pad - B), (0, 0)))
    x_p = x_p.astype(mm_dtype)

    w1, b1 = prepped["w1"], prepped["b1"]
    w2, b2 = prepped["w2"], prepped["b2"]
    w3, b3 = prepped["w3"], prepped["b3"]
    w4, b4 = prepped["w4"], prepped["b4"]

    grid = (b_pad // tm,)

    # Explicit scoped-VMEM budget (v7x physical limit is 64 MiB). Assume 2 weight buffers
    # (covers the fallback path) + double-buffered x/out tiles + f32 activation temps.
    w_isz = jnp.dtype(mm_dtype).itemsize
    weight_bytes = (f_in * hid_p + 2 * hid_p * hid_p + hid_p * out_p) * w_isz
    bias_bytes = 8 * (3 * hid_p + out_p) * 4               # sublane-padded (1, C) f32 rows
    io_bytes = 2 * tm * max(f_in, LANE) * w_isz + 2 * tm * out_p * jnp.dtype(out_dtype).itemsize
    temp_bytes = 4 * tm * hid_p * 4
    est = 2 * (weight_bytes + bias_bytes) + io_bytes + temp_bytes
    vmem_limit = int(min(64 * 1024 * 1024, max(32 * 1024 * 1024, 2 * est)))

    def run(weight_pipeline_mode):
        def resident(a):
            # Constant index_map -> stays VMEM-resident across batch grid steps.
            kwargs = {}
            if weight_pipeline_mode is not None:
                kwargs["pipeline_mode"] = weight_pipeline_mode
            return pl.BlockSpec(a.shape, lambda i: (0, 0), **kwargs)

        return pl.pallas_call(
            mlp3_kernel,
            out_shape=jax.ShapeDtypeStruct((b_pad, out_p), out_dtype),
            grid_spec=pltpu.PrefetchScalarGridSpec(
                num_scalar_prefetch=0,
                grid=grid,
                in_specs=[pl.BlockSpec((tm, f_in), lambda i: (i, 0)),   # x: true K, no lane pad
                          resident(w1), resident(b1),
                          resident(w2), resident(b2),
                          resident(w3), resident(b3),
                          resident(w4), resident(b4)],
                out_specs=pl.BlockSpec((tm, out_p), lambda i: (i, 0)),  # lane-dense stores
            ),
            compiler_params=pltpu.CompilerParams(
                dimension_semantics=("parallel",),   # batch tiles shard across TCs (v7x)
                vmem_limit_bytes=vmem_limit,
            ),
        )(x_p, w1, b1, w2, b2, w3, b3, w4, b4)

    try:
        out = run(pl.Buffered(1))   # single-buffer the resident weights/biases (half VMEM)
    except Exception:
        out = run(None)             # fallback: default buffering if pipeline_mode unsupported

    return out[:B, :f_out]


def init_params(key, inputs, hidden, outputs):
    """Deterministic init mimicking torch.nn.Linear (U(-1/sqrt(fan_in), 1/sqrt(fan_in))).
    Weights stored pre-transposed: [in_features, out_features]; biases as [1, out_features]."""
    def linear(k, fan_in, fan_out):
        kw, kb = jax.random.split(k)
        bound = 1.0 / jnp.sqrt(fan_in)
        w = jax.random.uniform(kw, (fan_in, fan_out), jnp.float32, -bound, bound)
        b = jax.random.uniform(kb, (1, fan_out), jnp.float32, -bound, bound)
        return w, b

    k1, k2, k3, k4 = jax.random.split(key, 4)
    w1, b1 = linear(k1, inputs, hidden)
    w2, b2 = linear(k2, hidden, hidden)
    w3, b3 = linear(k3, hidden, hidden)
    w4, b4 = linear(k4, hidden, outputs)
    return dict(w1=w1, b1=b1, w2=w2, b2=b2, w3=w3, b3=b3, w4=w4, b4=b4)


def mlp3_reference(x, p, matmul_dtype=jnp.float32):
    """Pure-JAX reference mirroring the kernel's precision choices."""
    def layer(h, w, b):
        acc = jnp.dot(h.astype(matmul_dtype), w.astype(matmul_dtype),
                      preferred_element_type=jnp.float32)
        return _leaky_relu(acc + b)

    h = layer(x, p["w1"], p["b1"])
    h = layer(h, p["w2"], p["b2"])
    h = layer(h, p["w3"], p["b3"])
    return layer(h, p["w4"], p["b4"])


if __name__ == "__main__":
    key = jax.random.PRNGKey(0)
    kx, kp, kx2 = jax.random.split(key, 3)

    batch, inputs, hidden, outputs = 8, 32, 32, 16
    x = jax.random.normal(kx, (batch, inputs), dtype=jnp.float32)
    params = init_params(kp, inputs, hidden, outputs)

    # 1) f32 MXU operand path vs pure-JAX reference (loose tol: MXU f32 pass strategies differ).
    pp32, meta32 = prepare_params(params, matmul_dtype=jnp.float32)
    y32 = jax.block_until_ready(mlp3_forward(x, pp32, meta32))
    ref32 = mlp3_reference(x, params, jnp.float32)
    assert y32.shape == (batch, outputs)
    assert jnp.allclose(y32, ref32, atol=2e-2, rtol=2e-2), "f32 mismatch vs reference"

    # 2) bf16 MXU operand path (perf default). Weights padded/cast exactly ONCE here.
    pp16, meta16 = prepare_params(params, matmul_dtype=jnp.bfloat16)
    y16 = jax.block_until_ready(mlp3_forward(x, pp16, meta16))
    ref16 = mlp3_reference(x, params, jnp.bfloat16)
    assert jnp.allclose(y16, ref16, atol=5e-2, rtol=5e-2), "bf16 mismatch vs reference"

    # 3) Larger batch: multi-step batch grid (>=2 tiles, v7x-style megacore split) + slice-back.
    big_b = 520
    xb = jax.random.normal(kx2, (big_b, inputs), dtype=jnp.float32)
    yb = jax.block_until_ready(
        mlp3_forward(xb, pp16, meta16, block_rows=256, min_batch_tiles=2))
    refb = mlp3_reference(xb, params, jnp.bfloat16)
    assert yb.shape == (big_b, outputs)
    assert jnp.allclose(yb, refb, atol=5e-2, rtol=5e-2), "tiled-batch mismatch vs reference"

    # TODO(synk): MLP3Model's pruning / masked-gradient / reinit utilities are training-time
    # host logic with no forward-pass Pallas equivalent; only forward() is implemented here.
    print("KERNEL_OK")
</pallas_src>

<mosaic_0001>
module attributes {stable_mosaic.version = 11 : i64} {
  func.func @mlp3_kernel(%arg0: i32, %arg1: memref<16x32xf32, #tpu.memory_space<vmem>>, %arg2: memref<32x128xf32, #tpu.memory_space<vmem>>, %arg3: memref<1x128xf32, #tpu.memory_space<vmem>>, %arg4: memref<128x128xf32, #tpu.memory_space<vmem>>, %arg5: memref<1x128xf32, #tpu.memory_space<vmem>>, %arg6: memref<128x128xf32, #tpu.memory_space<vmem>>, %arg7: memref<1x128xf32, #tpu.memory_space<vmem>>, %arg8: memref<128x128xf32, #tpu.memory_space<vmem>>, %arg9: memref<1x128xf32, #tpu.memory_space<vmem>>, %arg10: memref<16x128xf32, #tpu.memory_space<vmem>>) attributes {dimension_semantics = [#tpu.dimension_semantics<parallel>], iteration_bounds = array<i64: 1>, scalar_prefetch = 0 : i64, scratch_operands = 0 : i64, tpu.core_type = #tpu.core_type<tc>, window_params = [{transform_indices = @transform_0, window_bounds = array<i64: 16, 32>}, {pipeline_mode = #tpu.pipeline_mode<synchronous>, transform_indices = @transform_1, window_bounds = array<i64: 32, 128>}, {pipeline_mode = #tpu.pipeline_mode<synchronous>, transform_indices = @transform_2, window_bounds = array<i64: 1, 128>}, {pipeline_mode = #tpu.pipeline_mode<synchronous>, transform_indices = @transform_3, window_bounds = array<i64: 128, 128>}, {pipeline_mode = #tpu.pipeline_mode<synchronous>, transform_indices = @transform_4, window_bounds = array<i64: 1, 128>}, {pipeline_mode = #tpu.pipeline_mode<synchronous>, transform_indices = @transform_5, window_bounds = array<i64: 128, 128>}, {pipeline_mode = #tpu.pipeline_mode<synchronous>, transform_indices = @transform_6, window_bounds = array<i64: 1, 128>}, {pipeline_mode = #tpu.pipeline_mode<synchronous>, transform_indices = @transform_7, window_bounds = array<i64: 128, 128>}, {pipeline_mode = #tpu.pipeline_mode<synchronous>, transform_indices = @transform_8, window_bounds = array<i64: 1, 128>}, {transform_indices = @transform_9, window_bounds = array<i64: 16, 128>}]} {
    %c0 = arith.constant 0 : index
    %c0_0 = arith.constant 0 : index
    %0 = vector.load %arg1[%c0, %c0_0] : memref<16x32xf32, #tpu.memory_space<vmem>>, vector<16x32xf32>
    %c0_1 = arith.constant 0 : index
    %c0_2 = arith.constant 0 : index
    %1 = vector.load %arg2[%c0_1, %c0_2] : memref<32x128xf32, #tpu.memory_space<vmem>>, vector<32x128xf32>
    %cst = arith.constant dense<0.000000e+00> : vector<16x128xf32>
    %2 = tpu.matmul %0, %1, %cst {dimension_numbers = #tpu.dot_dimension_numbers<[1], [0], [0], [1], [0, 0, 1, 1], [], []>} : vector<16x32xf32>, vector<32x128xf32>, vector<16x128xf32> -> vector<16x128xf32>
    %c0_3 = arith.constant 0 : index
    %c0_4 = arith.constant 0 : index
    %3 = vector.load %arg3[%c0_3, %c0_4] : memref<1x128xf32, #tpu.memory_space<vmem>>, vector<1x128xf32>
    %4 = vector.broadcast %3 : vector<1x128xf32> to vector<16x128xf32>
    %5 = arith.addf %2, %4 : vector<16x128xf32>
    %cst_5 = arith.constant 0.00999999977 : f32
    %6 = vector.broadcast %cst_5 : f32 to vector<16x128xf32>
    %7 = arith.mulf %6, %5 : vector<16x128xf32>
    %8 = arith.maximumf %5, %7 : vector<16x128xf32>
    %c0_6 = arith.constant 0 : index
    %c0_7 = arith.constant 0 : index
    %9 = vector.load %arg4[%c0_6, %c0_7] : memref<128x128xf32, #tpu.memory_space<vmem>>, vector<128x128xf32>
    %cst_8 = arith.constant dense<0.000000e+00> : vector<16x128xf32>
    %10 = tpu.matmul %8, %9, %cst_8 {dimension_numbers = #tpu.dot_dimension_numbers<[1], [0], [0], [1], [0, 0, 1, 1], [], []>} : vector<16x128xf32>, vector<128x128xf32>, vector<16x128xf32> -> vector<16x128xf32>
    %c0_9 = arith.constant 0 : index
    %c0_10 = arith.constant 0 : index
    %11 = vector.load %arg5[%c0_9, %c0_10] : memref<1x128xf32, #tpu.memory_space<vmem>>, vector<1x128xf32>
    %12 = vector.broadcast %11 : vector<1x128xf32> to vector<16x128xf32>
    %13 = arith.addf %10, %12 : vector<16x128xf32>
    %cst_11 = arith.constant 0.00999999977 : f32
    %14 = vector.broadcast %cst_11 : f32 to vector<16x128xf32>
    %15 = arith.mulf %14, %13 : vector<16x128xf32>
    %16 = arith.maximumf %13, %15 : vector<16x128xf32>
    %c0_12 = arith.constant 0 : index
    %c0_13 = arith.constant 0 : index
    %17 = vector.load %arg6[%c0_12, %c0_13] : memref<128x128xf32, #tpu.memory_space<vmem>>, vector<128x128xf32>
    %cst_14 = arith.constant dense<0.000000e+00> : vector<16x128xf32>
    %18 = tpu.matmul %16, %17, %cst_14 {dimension_numbers = #tpu.dot_dimension_numbers<[1], [0], [0], [1], [0, 0, 1, 1], [], []>} : vector<16x128xf32>, vector<128x128xf32>, vector<16x128xf32> -> vector<16x128xf32>
    %c0_15 = arith.constant 0 : index
    %c0_16 = arith.constant 0 : index
    %19 = vector.load %arg7[%c0_15, %c0_16] : memref<1x128xf32, #tpu.memory_space<vmem>>, vector<1x128xf32>
    %20 = vector.broadcast %19 : vector<1x128xf32> to vector<16x128xf32>
    %21 = arith.addf %18, %20 : vector<16x128xf32>
    %cst_17 = arith.constant 0.00999999977 : f32
    %22 = vector.broadcast %cst_17 : f32 to vector<16x128xf32>
    %23 = arith.mulf %22, %21 : vector<16x128xf32>
    %24 = arith.maximumf %21, %23 : vector<16x128xf32>
    %c0_18 = arith.constant 0 : index
    %c0_19 = arith.constant 0 : index
    %25 = vector.load %arg8[%c0_18, %c0_19] : memref<128x128xf32, #tpu.memory_space<vmem>>, vector<128x128xf32>
    %cst_20 = arith.constant dense<0.000000e+00> : vector<16x128xf32>
    %26 = tpu.matmul %24, %25, %cst_20 {dimension_numbers = #tpu.dot_dimension_numbers<[1], [0], [0], [1], [0, 0, 1, 1], [], []>} : vector<16x128xf32>, vector<128x128xf32>, vector<16x128xf32> -> vector<16x128xf32>
    %c0_21 = arith.constant 0 : index
    %c0_22 = arith.constant 0 : index
    %27 = vector.load %arg9[%c0_21, %c0_22] : memref<1x128xf32, #tpu.memory_space<vmem>>, vector<1x128xf32>
    %28 = vector.broadcast %27 : vector<1x128xf32> to vector<16x128xf32>
    %29 = arith.addf %26, %28 : vector<16x128xf32>
    %cst_23 = arith.constant 0.00999999977 : f32
    %30 = vector.broadcast %cst_23 : f32 to vector<16x128xf32>
    %31 = arith.mulf %30, %29 : vector<16x128xf32>
    %32 = arith.maximumf %29, %31 : vector<16x128xf32>
    %c0_24 = arith.constant 0 : index
    %c0_25 = arith.constant 0 : index
    %33 = vector.load %arg10[%c0_24, %c0_25] : memref<16x128xf32, #tpu.memory_space<vmem>>, vector<16x128xf32>
    tpu.vector_store %arg10[%c0_24, %c0_25], %32 {strides = array<i32>} : memref<16x128xf32, #tpu.memory_space<vmem>>, vector<16x128xf32>,
    return
  }
  func.func @transform_0(%arg0: i32) -> (i32, i32) {
    %c0_i32 = arith.constant 0 : i32
    %c0_i32_0 = arith.constant 0 : i32
    return %arg0, %c0_i32 : i32, i32
  }
  func.func @transform_1(%arg0: i32) -> (i32, i32) {
    %c0_i32 = arith.constant 0 : i32
    %c0_i32_0 = arith.constant 0 : i32
    %c0_i32_1 = arith.constant 0 : i32
    return %c0_i32, %c0_i32_0 : i32, i32
  }
  func.func @transform_2(%arg0: i32) -> (i32, i32) {
    %c0_i32 = arith.constant 0 : i32
    %c0_i32_0 = arith.constant 0 : i32
    %c0_i32_1 = arith.constant 0 : i32
    return %c0_i32, %c0_i32_0 : i32, i32
  }
  func.func @transform_3(%arg0: i32) -> (i32, i32) {
    %c0_i32 = arith.constant 0 : i32
    %c0_i32_0 = arith.constant 0 : i32
    %c0_i32_1 = arith.constant 0 : i32
    return %c0_i32, %c0_i32_0 : i32, i32
  }
  func.func @transform_4(%arg0: i32) -> (i32, i32) {
    %c0_i32 = arith.constant 0 : i32
    %c0_i32_0 = arith.constant 0 : i32
    %c0_i32_1 = arith.constant 0 : i32
    return %c0_i32, %c0_i32_0 : i32, i32
  }
  func.func @transform_5(%arg0: i32) -> (i32, i32) {
    %c0_i32 = arith.constant 0 : i32
    %c0_i32_0 = arith.constant 0 : i32
    %c0_i32_1 = arith.constant 0 : i32
    return %c0_i32, %c0_i32_0 : i32, i32
  }
  func.func @transform_6(%arg0: i32) -> (i32, i32) {
    %c0_i32 = arith.constant 0 : i32
    %c0_i32_0 = arith.constant 0 : i32
    %c0_i32_1 = arith.constant 0 : i32
    return %c0_i32, %c0_i32_0 : i32, i32
  }
  func.func @transform_7(%arg0: i32) -> (i32, i32) {
    %c0_i32 = arith.constant 0 : i32
    %c0_i32_0 = arith.constant 0 : i32
    %c0_i32_1 = arith.constant 0 : i32
    return %c0_i32, %c0_i32_0 : i32, i32
  }
  func.func @transform_8(%arg0: i32) -> (i32, i32) {
    %c0_i32 = arith.constant 0 : i32
    %c0_i32_0 = arith.constant 0 : i32
    %c0_i32_1 = arith.constant 0 : i32
    return %c0_i32, %c0_i32_0 : i32, i32
  }
  func.func @transform_9(%arg0: i32) -> (i32, i32) {
    %c0_i32 = arith.constant 0 : i32
    %c0_i32_0 = arith.constant 0 : i32
    return %arg0, %c0_i32 : i32, i32
  }
}

module attributes {stable_mosaic.version = 11 : i64} {
  func.func @mlp3_kernel(%arg0: i32, %arg1: memref<16x32xf32, #tpu.memory_space<vmem>>, %arg2: memref<32x128xf32, #tpu.memory_space<vmem>>, %arg3: memref<1x128xf32, #tpu.memory_space<vmem>>, %arg4: memref<128x128xf32, #tpu.memory_space<vmem>>, %arg5: memref<1x128xf32, #tpu.memory_space<vmem>>, %arg6: memref<128x128xf32, #tpu.memory_space<vmem>>, %arg7: memref<1x128xf32, #tpu.memory_space<vmem>>, %arg8: memref<128x128xf32, #tpu.memory_space<vmem>>, %arg9: memref<1x128xf32, #tpu.memory_space<vmem>>, %arg10: memref<16x128xf32, #tpu.memory_space<vmem>>) attributes {dimension_semantics = [#tpu.dimension_semantics<parallel>], iteration_bounds = array<i64: 1>, scalar_prefetch = 0 : i64, scratch_operands = 0 : i64, tpu.core_type = #tpu.core_type<tc>, window_params = [{transform_indices = @transform_0, window_bounds = array<i64: 16, 32>}, {pipeline_mode = #tpu.pipeline_mode<synchronous>, transform_indices = @transform_1, window_bounds = array<i64: 32, 128>}, {pipeline_mode = #tpu.pipeline_mode<synchronous>, transform_indices = @transform_2, window_bounds = array<i64: 1, 128>}, {pipeline_mode = #tpu.pipeline_mode<synchronous>, transform_indices = @transform_3, window_bounds = array<i64: 128, 128>}, {pipeline_mode = #tpu.pipeline_mode<synchronous>, transform_indices = @transform_4, window_bounds = array<i64: 1, 128>}, {pipeline_mode = #tpu.pipeline_mode<synchronous>, transform_indices = @transform_5, window_bounds = array<i64: 128, 128>}, {pipeline_mode = #tpu.pipeline_mode<synchronous>, transform_indices = @transform_6, window_bounds = array<i64: 1, 128>}, {pipeline_mode = #tpu.pipeline_mode<synchronous>, transform_indices = @transform_7, window_bounds = array<i64: 128, 128>}, {pipeline_mode = #tpu.pipeline_mode<synchronous>, transform_indices = @transform_8, window_bounds = array<i64: 1, 128>}, {transform_indices = @transform_9, window_bounds = array<i64: 16, 128>}]} {
    %c0 = arith.constant 0 : index
    %c0_0 = arith.constant 0 : index
    %0 = vector.load %arg1[%c0, %c0_0] : memref<16x32xf32, #tpu.memory_space<vmem>>, vector<16x32xf32>
    %c0_1 = arith.constant 0 : index
    %c0_2 = arith.constant 0 : index
    %1 = vector.load %arg2[%c0_1, %c0_2] : memref<32x128xf32, #tpu.memory_space<vmem>>, vector<32x128xf32>
    %cst = arith.constant dense<0.000000e+00> : vector<16x128xf32>
    %2 = tpu.matmul %0, %1, %cst {dimension_numbers = #tpu.dot_dimension_numbers<[1], [0], [0], [1], [0, 0, 1, 1], [], []>} : vector<16x32xf32>, vector<32x128xf32>, vector<16x128xf32> -> vector<16x128xf32>
    %c0_3 = arith.constant 0 : index
    %c0_4 = arith.constant 0 : index
    %3 = vector.load %arg3[%c0_3, %c0_4] : memref<1x128xf32, #tpu.memory_space<vmem>>, vector<1x128xf32>
    %4 = vector.broadcast %3 : vector<1x128xf32> to vector<16x128xf32>
    %5 = arith.addf %2, %4 : vector<16x128xf32>
    %cst_5 = arith.constant 0.00999999977 : f32
    %6 = vector.broadcast %cst_5 : f32 to vector<16x128xf32>
    %7 = arith.mulf %6, %5 : vector<16x128xf32>
    %8 = arith.maximumf %5, %7 : vector<16x128xf32>
    %c0_6 = arith.constant 0 : index
    %c0_7 = arith.constant 0 : index
    %9 = vector.load %arg4[%c0_6, %c0_7] : memref<128x128xf32, #tpu.memory_space<vmem>>, vector<128x128xf32>
    %cst_8 = arith.constant dense<0.000000e+00> : vector<16x128xf32>
    %10 = tpu.matmul %8, %9, %cst_8 {dimension_numbers = #tpu.dot_dimension_numbers<[1], [0], [0], [1], [0, 0, 1, 1], [], []>} : vector<16x128xf32>, vector<128x128xf32>, vector<16x128xf32> -> vector<16x128xf32>
    %c0_9 = arith.constant 0 : index
    %c0_10 = arith.constant 0 : index
    %11 = vector.load %arg5[%c0_9, %c0_10] : memref<1x128xf32, #tpu.memory_space<vmem>>, vector<1x128xf32>
    %12 = vector.broadcast %11 : vector<1x128xf32> to vector<16x128xf32>
    %13 = arith.addf %10, %12 : vector<16x128xf32>
    %cst_11 = arith.constant 0.00999999977 : f32
    %14 = vector.broadcast %cst_11 : f32 to vector<16x128xf32>
    %15 = arith.mulf %14, %13 : vector<16x128xf32>
    %16 = arith.maximumf %13, %15 : vector<16x128xf32>
    %c0_12 = arith.constant 0 : index
    %c0_13 = arith.constant 0 : index
    %17 = vector.load %arg6[%c0_12, %c0_13] : memref<128x128xf32, #tpu.memory_space<vmem>>, vector<128x128xf32>
    %cst_14 = arith.constant dense<0.000000e+00> : vector<16x128xf32>
    %18 = tpu.matmul %16, %17, %cst_14 {dimension_numbers = #tpu.dot_dimension_numbers<[1], [0], [0], [1], [0, 0, 1, 1], [], []>} : vector<16x128xf32>, vector<128x128xf32>, vector<16x128xf32> -> vector<16x128xf32>
    %c0_15 = arith.constant 0 : index
    %c0_16 = arith.constant 0 : index
    %19 = vector.load %arg7[%c0_15, %c0_16] : memref<1x128xf32, #tpu.memory_space<vmem>>, vector<1x128xf32>
    %20 = vector.broadcast %19 : vector<1x128xf32> to vector<16x128xf32>
    %21 = arith.addf %18, %20 : vector<16x128xf32>
    %cst_17 = arith.constant 0.00999999977 : f32
    %22 = vector.broadcast %cst_17 : f32 to vector<16x128xf32>
    %23 = arith.mulf %22, %21 : vector<16x128xf32>
    %24 = arith.maximumf %21, %23 : vector<16x128xf32>
    %c0_18 = arith.constant 0 : index
    %c0_19 = arith.constant 0 : index
    %25 = vector.load %arg8[%c0_18, %c0_19] : memref<128x128xf32, #tpu.memory_space<vmem>>, vector<128x128xf32>
    %cst_20 = arith.constant dense<0.000000e+00> : vector<16x128xf32>
    %26 = tpu.matmul %24, %25, %cst_20 {dimension_numbers = #tpu.dot_dimension_numbers<[1], [0], [0], [1], [0, 0, 1, 1], [], []>} : vector<16x128xf32>, vector<128x128xf32>, vector<16x128xf32> -> vector<16x128xf32>
    %c0_21 = arith.constant 0 : index
    %c0_22 = arith.constant 0 : index
    %27 = vector.load %arg9[%c0_21, %c0_22] : memref<1x128xf32, #tpu.memory_space<vmem>>, vector<1x128xf32>
    %28 = vector.broadcast %27 : vector<1x128xf32> to vector<16x128xf32>
    %29 = arith.addf %26, %28 : vector<16x128xf32>
    %cst_23 = arith.constant 0.00999999977 : f32
    %30 = vector.broadcast %cst_23 : f32 to vector<16x128xf32>
    %31 = arith.mulf %30, %29 : vector<16x128xf32>
    %32 = arith.maximumf %29, %31 : vector<16x128xf32>
    %c0_24 = arith.constant 0 : index
    %c0_25 = arith.constant 0 : index
    %33 = vector.load %arg10[%c0_24, %c0_25] : memref<16x128xf32, #tpu.memory_space<vmem>>, vector<16x128xf32>
    tpu.vector_store %arg10[%c0_24, %c0_25], %32 {strides = array<i32>} : memref<16x128xf32, #tpu.memory_space<vmem>>, vector<16x128xf32>,
    return
  }
  func.func @transform_0(%arg0: i32) -> (i32, i32) {
    %c0_i32 = arith.constant 0 : i32
    %c0_i32_0 = arith.constant 0 : i32
    return %arg0, %c0_i32 : i32, i32
  }
  func.func @transform_1(%arg0: i32) -> (i32, i32) {
    %c0_i32 = arith.constant 0 : i32
    %c0_i32_0 = arith.constant 0 : i32
    %c0_i32_1 = arith.constant 0 : i32
    return %c0_i32, %c0_i32_0 : i32, i32
  }
  func.func @transform_2(%arg0: i32) -> (i32, i32) {
    %c0_i32 = arith.constant 0 : i32
    %c0_i32_0 = arith.constant 0 : i32
    %c0_i32_1 = arith.constant 0 : i32
    return %c0_i32, %c0_i32_0 : i32, i32
  }
  func.func @transform_3(%arg0: i32) -> (i32, i32) {
    %c0_i32 = arith.constant 0 : i32
    %c0_i32_0 = arith.constant 0 : i32
    %c0_i32_1 = arith.constant 0 : i32
    return %c0_i32, %c0_i32_0 : i32, i32
  }
  func.func @transform_4(%arg0: i32) -> (i32, i32) {
    %c0_i32 = arith.constant 0 : i32
    %c0_i32_0 = arith.constant 0 : i32
    %c0_i32_1 = arith.constant 0 : i32
    return %c0_i32, %c0_i32_0 : i32, i32
  }
  func.func @transform_5(%arg0: i32) -> (i32, i32) {
    %c0_i32 = arith.constant 0 : i32
    %c0_i32_0 = arith.constant 0 : i32
    %c0_i32_1 = arith.constant 0 : i32
    return %c0_i32, %c0_i32_0 : i32, i32
  }
  func.func @transform_6(%arg0: i32) -> (i32, i32) {
    %c0_i32 = arith.constant 0 : i32
    %c0_i32_0 = arith.constant 0 : i32
    %c0_i32_1 = arith.constant 0 : i32
    return %c0_i32, %c0_i32_0 : i32, i32
  }
  func.func @transform_7(%arg0: i32) -> (i32, i32) {
    %c0_i32 = arith.constant 0 : i32
    %c0_i32_0 = arith.constant 0 : i32
    %c0_i32_1 = arith.constant 0 : i32
    return %c0_i32, %c0_i32_0 : i32, i32
  }
  func.func @transform_8(%arg0: i32) -> (i32, i32) {
    %c0_i32 = arith.constant 0 : i32
    %c0_i32_0 = arith.constant 0 : i32
    %c0_i32_1 = arith.constant 0 : i32
    return %c0_i32, %c0_i32_0 : i32, i32
  }
  func.func @transform_9(%arg0: i32) -> (i32, i32) {
    %c0_i32 = arith.constant 0 : i32
    %c0_i32_0 = arith.constant 0 : i32
    return %arg0, %c0_i32 : i32, i32
  }
}

</mosaic_0001>

<llo_original>
// kernel: tpu_custom_call.1
$region0: #{tpu_custom_call.1}
  #allocation0 [shape = 'u32[]', space=smem, size = 0x4, offset = 0x4, fixed_abs, tag = 'smem constant byte address 0x4 - core index']
  #allocation1 [shape = 'u32[144,128]{1,0:T(1,128)}', space=vmem, size = 0x12000, scoped, tag = 'internal scratch']
  %s0 = inlined_call_operand.hbm [shape: f32[16,32], index: 0, kind: input, shape index: {}]
  %s1 = inlined_call_operand.hbm [shape: f32[32,128], index: 1, kind: input, shape index: {}]
  %s2 = inlined_call_operand.vmem [shape: f32[1,128], index: 2, kind: input, shape index: {}]
  %s3 = inlined_call_operand.hbm [shape: f32[128,128], index: 3, kind: input, shape index: {}]
  %s4 = inlined_call_operand.vmem [shape: f32[1,128], index: 4, kind: input, shape index: {}]
  %s5 = inlined_call_operand.hbm [shape: f32[128,128], index: 5, kind: input, shape index: {}]
  %s6 = inlined_call_operand.vmem [shape: f32[1,128], index: 6, kind: input, shape index: {}]
  %s7 = inlined_call_operand.hbm [shape: f32[128,128], index: 7, kind: input, shape index: {}]
  %s8 = inlined_call_operand.vmem [shape: f32[1,128], index: 8, kind: input, shape index: {}]
  %s9 = inlined_call_operand.hbm [shape: f32[16,128], index: 9, kind: output, shape index: {}]
  %s10 = sld [smem:[#allocation0]]
  $region66: #{tpu_custom_call.1} parent=0
    _
  %s12 = ssub.s32 1, %s10
  %s13 = scalar_select 0, %s12, %s10
  $region1: #{tpu_custom_call.1} parent=0
    #allocation2 [shape = 'u8[8192]{0}', space=vmem, size = 0x2000, scoped, tag = 'input window, operand 0, single buffered']
    #allocation3 [shape = 's32[1]{0}', space=sflag, size = 0x4, scoped, tag = 'scoped memory for tpu_custom_call.1']
    #allocation4 [shape = 's32[1]{0}', space=sflag, size = 0x4, scoped, tag = 'scoped memory for tpu_custom_call.1']
    #allocation5 [shape = 'u8[16384]{0}', space=vmem, size = 0x4000, scoped, tag = 'input window, operand 1, single buffered']
    #allocation6 [shape = 's32[1]{0}', space=sflag, size = 0x4, scoped, tag = 'scoped memory for tpu_custom_call.1']
    #allocation7 [shape = 'u8[65536]{0}', space=vmem, size = 0x10000, scoped, tag = 'input window, operand 3, single buffered']
    #allocation8 [shape = 'u8[65536]{0}', space=vmem, size = 0x10000, scoped, tag = 'input window, operand 5, single buffered']
    #allocation9 [shape = 's32[1]{0}', space=sflag, size = 0x4, scoped, tag = 'scoped memory for tpu_custom_call.1']
    #allocation10 [shape = 'u8[65536]{0}', space=vmem, size = 0x10000, scoped, tag = 'input window, operand 7, single buffered']
    #allocation11 [shape = 'u8[8192]{0}', space=vmem, size = 0x2000, scoped, tag = 'output window, operand 0, single buffered']
    %14 = vsyncpa [#allocation3], 0
    %15 = vsyncpa [#allocation6], 0
    %16 = vsyncpa [#allocation9], 0
    %17 = vsyncpa [#allocation4], 0
    // Predicated region
    $region2: #{tpu_custom_call.1} parent=1 // pred_check
      _
    $region3: #{tpu_custom_call.1} parent=1 // pred_check_branch
      %19 = sbr.rel (0) target = $region5
    $region4: #{tpu_custom_call.1} parent=1 // pred_region
      %s21 = ssub.s32 256, 256
      %22 = vsyncadd [#allocation3], %s21
      %s23 = sshll.u32 [#allocation2], 4
      %s24 = int_to_ptr.vmem [resolvable:$true] %s23
      %29 = dma.hbm_to_vmem [thread:$0]  %s0, 256, %s24, [#allocation3], 128, 128, 8
    $region5: #{tpu_custom_call.1} parent=1 // pred_fallthru
      _
    // Predicated region
    $region6: #{tpu_custom_call.1} parent=1 // pred_check
      _
    $region7: #{tpu_custom_call.1} parent=1 // pred_check_branch
      %31 = sbr.rel (0) target = $region9
    $region8: #{tpu_custom_call.1} parent=1 // pred_region
      %s33 = ssub.s32 512, 512
      %34 = vsyncadd [#allocation6], %s33
      %s35 = sshll.u32 [#allocation5], 4
      %s36 = int_to_ptr.vmem [resolvable:$true] %s35
      %41 = dma.hbm_to_vmem [thread:$0]  %s1, 512, %s36, [#allocation6], 128, 128, 8
    $region9: #{tpu_custom_call.1} parent=1 // pred_fallthru
      _
    // Predicated region
    $region10: #{tpu_custom_call.1} parent=1 // pred_check
      _
    $region11: #{tpu_custom_call.1} parent=1 // pred_check_branch
      %43 = sbr.rel (0) target = $region13
    $region12: #{tpu_custom_call.1} parent=1 // pred_region
      _
    $region13: #{tpu_custom_call.1} parent=1 // pred_fallthru
      _
    // Predicated region
    $region14: #{tpu_custom_call.1} parent=1 // pred_check
      _
    $region15: #{tpu_custom_call.1} parent=1 // pred_check_branch
      %45 = sbr.rel (0) target = $region17
    $region16: #{tpu_custom_call.1} parent=1 // pred_region
      %s47 = ssub.s32 2048, 2048
      %48 = vsyncadd [#allocation6], %s47
      %s49 = sshll.u32 [#allocation7], 4
      %s50 = int_to_ptr.vmem [resolvable:$true] %s49
      %55 = dma.hbm_to_vmem [thread:$0]  %s3, 2048, %s50, [#allocation6], 128, 128, 8
    $region17: #{tpu_custom_call.1} parent=1 // pred_fallthru
      _
    // Predicated region
    $region18: #{tpu_custom_call.1} parent=1 // pred_check
      _
    $region19: #{tpu_custom_call.1} parent=1 // pred_check_branch
      %57 = sbr.rel (0) target = $region21
    $region20: #{tpu_custom_call.1} parent=1 // pred_region
      _
    $region21: #{tpu_custom_call.1} parent=1 // pred_fallthru
      _
    // Predicated region
    $region22: #{tpu_custom_call.1} parent=1 // pred_check
      _
    $region23: #{tpu_custom_call.1} parent=1 // pred_check_branch
      %59 = sbr.rel (0) target = $region25
    $region24: #{tpu_custom_call.1} parent=1 // pred_region
      %s61 = ssub.s32 2048, 2048
      %62 = vsyncadd [#allocation9], %s61
      %s63 = sshll.u32 [#allocation8], 4
      %s64 = int_to_ptr.vmem [resolvable:$true] %s63
      %69 = dma.hbm_to_vmem [thread:$0]  %s5, 2048, %s64, [#allocation9], 128, 128, 8
    $region25: #{tpu_custom_call.1} parent=1 // pred_fallthru
      _
    // Predicated region
    $region26: #{tpu_custom_call.1} parent=1 // pred_check
      _
    $region27: #{tpu_custom_call.1} parent=1 // pred_check_branch
      %71 = sbr.rel (0) target = $region29
    $region28: #{tpu_custom_call.1} parent=1 // pred_region
      _
    $region29: #{tpu_custom_call.1} parent=1 // pred_fallthru
      _
    // Predicated region
    $region30: #{tpu_custom_call.1} parent=1 // pred_check
      _
    $region31: #{tpu_custom_call.1} parent=1 // pred_check_branch
      %73 = sbr.rel (0) target = $region33
    $region32: #{tpu_custom_call.1} parent=1 // pred_region
      %s75 = ssub.s32 2048, 2048
      %76 = vsyncadd [#allocation9], %s75
      %s77 = sshll.u32 [#allocation10], 4
      %s78 = int_to_ptr.vmem [resolvable:$true] %s77
      %83 = dma.hbm_to_vmem [thread:$0]  %s7, 2048, %s78, [#allocation9], 128, 128, 8
    $region33: #{tpu_custom_call.1} parent=1 // pred_fallthru
      _
    // Predicated region
    $region34: #{tpu_custom_call.1} parent=1 // pred_check
      _
    $region35: #{tpu_custom_call.1} parent=1 // pred_check_branch
      %85 = sbr.rel (0) target = $region37
    $region36: #{tpu_custom_call.1} parent=1 // pred_region
      _
    $region37: #{tpu_custom_call.1} parent=1 // pred_fallthru
      _
    // Predicated region
    $region38: #{tpu_custom_call.1} parent=1 // pred_check
      _
    $region39: #{tpu_custom_call.1} parent=1 // pred_check_branch
      %87 = sbr.rel (0) target = $region41
    $region40: #{tpu_custom_call.1} parent=1 // pred_region
      %88 = dma.done [#allocation3], 256
    $region41: #{tpu_custom_call.1} parent=1 // pred_fallthru
      _
    // Predicated region
    $region42: #{tpu_custom_call.1} parent=1 // pred_check
      _
    $region43: #{tpu_custom_call.1} parent=1 // pred_check_branch
      %90 = sbr.rel (0) target = $region45
    $region44: #{tpu_custom_call.1} parent=1 // pred_region
      %91 = dma.done [#allocation6], 512
    $region45: #{tpu_custom_call.1} parent=1 // pred_fallthru
      _
    // Predicated region
    $region46: #{tpu_custom_call.1} parent=1 // pred_check
      _
    $region47: #{tpu_custom_call.1} parent=1 // pred_check_branch
      %93 = sbr.rel (0) target = $region49
    $region48: #{tpu_custom_call.1} parent=1 // pred_region
      %94 = dma.done [#allocation6], 2048
    $region49: #{tpu_custom_call.1} parent=1 // pred_fallthru
      _
    // Predicated region
    $region50: #{tpu_custom_call.1} parent=1 // pred_check
      _
    $region51: #{tpu_custom_call.1} parent=1 // pred_check_branch
      %96 = sbr.rel (0) target = $region53
    $region52: #{tpu_custom_call.1} parent=1 // pred_region
      %97 = dma.done [#allocation9], 2048
    $region53: #{tpu_custom_call.1} parent=1 // pred_fallthru
      _
    // Predicated region
    $region54: #{tpu_custom_call.1} parent=1 // pred_check
      _
    $region55: #{tpu_custom_call.1} parent=1 // pred_check_branch
      %99 = sbr.rel (0) target = $region57
    $region56: #{tpu_custom_call.1} parent=1 // pred_region
      %100 = dma.done [#allocation9], 2048
    $region57: #{tpu_custom_call.1} parent=1 // pred_fallthru
      _
    %v101 = vld [vmem:[#allocation2] sm:$0xff]
    %v102 = vld [vmem:[#allocation2 + $0x8] sm:$0xff]
    %v103 = vld [vmem:[#allocation5] sm:$0xff]
    %v104 = vld [vmem:[#allocation5 + $0x8] sm:$0xff]
    %v105 = vld [vmem:[#allocation5 + $0x10] sm:$0xff]
    %v106 = vld [vmem:[#allocation5 + $0x18] sm:$0xff]
    %v107 = vld [vmem:[%s2] sm:$0x1]
    %v109 = vlaneseq
    %v110 = vshrl.u32 %v109, 7
    %v111 = vsub.s32 0, %v110
    %v112 = vrot.slane %v107, %v111
    %vm114 = vcmask 261120
    %v116 = vsel %vm114, %v101, 0
    %v119 = vsel %vm114, %v102, 0
    %121 = vmatprep.subr.mxu0 0.0
    %122 = vmatpush1.msra.mxu0 %v103
    %123 = vmatprep.subr.mxu0 0.0
    %124 = vmatpush1.msra.mxu0 %v104
    %125 = vmatprep.subr.mxu0 0.0
    %126 = vmatpush1.msra.mxu0 %v105
    %127 = vmatprep.subr.mxu0 0.0
    %128 = vmatpush1.msra.mxu0 %v106
    %129 = vmatprep.subr.mxu0 0.0
    %130 = vmatpush1.msra.mxu0 0.0
    %131 = vmatprep.subr.mxu0 0.0
    %132 = vmatpush1.msra.mxu0 0.0
    %133 = vmatprep.subr.mxu0 0.0
    %134 = vmatpush1.msra.mxu0 0.0
    %135 = vmatprep.subr.mxu0 0.0
    %136 = vmatpush1.msra.mxu0 0.0
    %137 = vmatprep.subr.mxu0 0.0
    %138 = vmatpush1.msra.mxu0 0.0
    %139 = vmatprep.subr.mxu0 0.0
    %140 = vmatpush1.msra.mxu0 0.0
    %141 = vmatprep.subr.mxu0 0.0
    %142 = vmatpush1.msra.mxu0 0.0
    %143 = vmatprep.subr.mxu0 0.0
    %144 = vmatpush1.msra.mxu0 0.0
    %145 = vmatprep.subr.mxu0 0.0
    %146 = vmatpush1.msra.mxu0 0.0
    %147 = vmatprep.subr.mxu0 0.0
    %148 = vmatpush1.msra.mxu0 0.0
    %149 = vmatprep.subr.mxu0 0.0
    %150 = vmatpush1.msra.mxu0 0.0
    %151 = vmatprep.subr.mxu0 0.0
    %152 = vmatpush1.msra.mxu0 0.0
    %153 = vmatprep.subr.mxu0 0.0
    %154 = vmatpush1.msra.mxu0 0.0
    %155 = vmatprep.subr.mxu0 0.0
    %156 = vmatpush1.msra.mxu0 0.0
    %157 = vmatprep.subr.mxu0 0.0
    %158 = vmatpush1.msra.mxu0 0.0
    %159 = vmatprep.subr.mxu0 0.0
    %160 = vmatpush1.msra.mxu0 0.0
    %161 = vmatprep.subr.mxu0 0.0
    %162 = vmatpush1.msra.mxu0 0.0
    %163 = vmatprep.subr.mxu0 0.0
    %164 = vmatpush1.msra.mxu0 0.0
    %165 = vmatprep.subr.mxu0 0.0
    %166 = vmatpush1.msra.mxu0 0.0
    %167 = vmatprep.subr.mxu0 0.0
    %168 = vmatpush1.msra.mxu0 0.0
    %169 = vmatprep.subr.mxu0 0.0
    %170 = vmatpush1.msra.mxu0 0.0
    %171 = vmatprep.subr.mxu0 0.0
    %172 = vmatpush1.msra.mxu0 0.0
    %173 = vmatprep.subr.mxu0 0.0
    %174 = vmatpush1.msra.mxu0 0.0
    %175 = vmatprep.subr.mxu0 0.0
    %176 = vmatpush1.msra.mxu0 0.0
    %177 = vmatprep.subr.mxu0 0.0
    %178 = vmatpush1.msra.mxu0 0.0
    %179 = vmatprep.subr.mxu0 0.0
    %180 = vmatpush1.msra.mxu0 0.0
    %181 = vmatprep.subr.mxu0 0.0
    %182 = vmatpush1.msra.mxu0 0.0
    %183 = vmatprep.subr.mxu0 0.0
    %184 = vmatpush1.msra.mxu0 0.0
    %185 = vmatprep.mubr.f32.mxu0 0.0
    %186 = vmatmul.mubr.f32.gmra.mrb[0].mxu0 %v116
    %v187 = vpop.f32.mrb[0].mxu0
    %v188 = vadd.f32 %v112, %v187
    %v189 = vpop.f32.mrb[0].mxu0
    %190 = vmatprep.mubr.f32.mxu0 0.0
    %191 = vmatmul.mubr.f32.gmra.mrb[0].mxu0 %v119
    %v192 = vpop.f32.mrb[0].mxu0
    %v193 = vadd.f32 %v112, %v192
    %v194 = vpop.f32.mrb[0].mxu0
    %195 = vdwg.mxu0
    %v196 = vmul.f32 %v188, 0.01
    %v197 = vmul.f32 %v193, 0.01
    %v198 = vmax.f32 %v188, %v196
    %v199 = vmax.f32 %v193, %v197
    %v200 = vld [vmem:[#allocation7] sm:$0xff]
    %v201 = vld [vmem:[#allocation7 + $0x8] sm:$0xff]
    %v202 = vld [vmem:[#allocation7 + $0x10] sm:$0xff]
    %v203 = vld [vmem:[#allocation7 + $0x18] sm:$0xff]
    %v204 = vld [vmem:[#allocation7 + $0x20] sm:$0xff]
    %v205 = vld [vmem:[#allocation7 + $0x28] sm:$0xff]
    %v206 = vld [vmem:[#allocation7 + $0x30] sm:$0xff]
    %v207 = vld [vmem:[#allocation7 + $0x38] sm:$0xff]
    %v208 = vld [vmem:[#allocation7 + $0x40] sm:$0xff]
    %v209 = vld [vmem:[#allocation7 + $0x48] sm:$0xff]
    %v210 = vld [vmem:[#allocation7 + $0x50] sm:$0xff]
    %v211 = vld [vmem:[#allocation7 + $0x58] sm:$0xff]
    %v212 = vld [vmem:[#allocation7 + $0x60] sm:$0xff]
    %v213 = vld [vmem:[#allocation7 + $0x68] sm:$0xff]
    %v214 = vld [vmem:[#allocation7 + $0x70] sm:$0xff]
    %v215 = vld [vmem:[#allocation7 + $0x78] sm:$0xff]
    %v216 = vld [vmem:[%s4] sm:$0x1]
    %v218 = vlaneseq
    %v219 = vshrl.u32 %v218, 7
    %v220 = vsub.s32 0, %v219
    %v221 = vrot.slane %v216, %v220
    %223 = vmatprep.subr.mxu0 0.0
    %224 = vmatpush1.msra.mxu0 %v200
    %225 = vmatprep.subr.mxu0 0.0
    %226 = vmatpush1.msra.mxu0 %v201
    %227 = vmatprep.subr.mxu0 0.0
    %228 = vmatpush1.msra.mxu0 %v202
    %229 = vmatprep.subr.mxu0 0.0
    %230 = vmatpush1.msra.mxu0 %v203
    %231 = vmatprep.subr.mxu0 0.0
    %232 = vmatpush1.msra.mxu0 %v204
    %233 = vmatprep.subr.mxu0 0.0
    %234 = vmatpush1.msra.mxu0 %v205
    %235 = vmatprep.subr.mxu0 0.0
    %236 = vmatpush1.msra.mxu0 %v206
    %237 = vmatprep.subr.mxu0 0.0
    %238 = vmatpush1.msra.mxu0 %v207
    %239 = vmatprep.subr.mxu0 0.0
    %240 = vmatpush1.msra.mxu0 %v208
    %241 = vmatprep.subr.mxu0 0.0
    %242 = vmatpush1.msra.mxu0 %v209
    %243 = vmatprep.subr.mxu0 0.0
    %244 = vmatpush1.msra.mxu0 %v210
    %245 = vmatprep.subr.mxu0 0.0
    %246 = vmatpush1.msra.mxu0 %v211
    %247 = vmatprep.subr.mxu0 0.0
    %248 = vmatpush1.msra.mxu0 %v212
    %249 = vmatprep.subr.mxu0 0.0
    %250 = vmatpush1.msra.mxu0 %v213
    %251 = vmatprep.subr.mxu0 0.0
    %252 = vmatpush1.msra.mxu0 %v214
    %253 = vmatprep.subr.mxu0 0.0
    %254 = vmatpush1.msra.mxu0 %v215
    %255 = vmatprep.subr.mxu0 0.0
    %256 = vmatpush1.msra.mxu0 0.0
    %257 = vmatprep.subr.mxu0 0.0
    %258 = vmatpush1.msra.mxu0 0.0
    %259 = vmatprep.subr.mxu0 0.0
    %260 = vmatpush1.msra.mxu0 0.0
    %261 = vmatprep.subr.mxu0 0.0
    %262 = vmatpush1.msra.mxu0 0.0
    %263 = vmatprep.subr.mxu0 0.0
    %264 = vmatpush1.msra.mxu0 0.0
    %265 = vmatprep.subr.mxu0 0.0
    %266 = vmatpush1.msra.mxu0 0.0
    %267 = vmatprep.subr.mxu0 0.0
    %268 = vmatpush1.msra.mxu0 0.0
    %269 = vmatprep.subr.mxu0 0.0
    %270 = vmatpush1.msra.mxu0 0.0
    %271 = vmatprep.subr.mxu0 0.0
    %272 = vmatpush1.msra.mxu0 0.0
    %273 = vmatprep.subr.mxu0 0.0
    %274 = vmatpush1.msra.mxu0 0.0
    %275 = vmatprep.subr.mxu0 0.0
    %276 = vmatpush1.msra.mxu0 0.0
    %277 = vmatprep.subr.mxu0 0.0
    %278 = vmatpush1.msra.mxu0 0.0
    %279 = vmatprep.subr.mxu0 0.0
    %280 = vmatpush1.msra.mxu0 0.0
    %281 = vmatprep.subr.mxu0 0.0
    %282 = vmatpush1.msra.mxu0 0.0
    %283 = vmatprep.subr.mxu0 0.0
    %284 = vmatpush1.msra.mxu0 0.0
    %285 = vmatprep.subr.mxu0 0.0
    %286 = vmatpush1.msra.mxu0 0.0
    %287 = vmatprep.mubr.f32.mxu0 0.0
    %288 = vmatmul.mubr.f32.gmra.mrb[0].mxu0 %v198
    %v289 = vpop.f32.mrb[0].mxu0
    %v290 = vadd.f32 %v221, %v289
    %v291 = vpop.f32.mrb[0].mxu0
    %292 = vmatprep.mubr.f32.mxu0 0.0
    %293 = vmatmul.mubr.f32.gmra.mrb[0].mxu0 %v199
    %v294 = vpop.f32.mrb[0].mxu0
    %v295 = vadd.f32 %v221, %v294
    %v296 = vpop.f32.mrb[0].mxu0
    %297 = vdwg.mxu0
    %v298 = vmul.f32 %v290, 0.01
    %v299 = vmul.f32 %v295, 0.01
    %v300 = vmax.f32 %v290, %v298
    %v301 = vmax.f32 %v295, %v299
    %v302 = vld [vmem:[#allocation8] sm:$0xff]
    %v303 = vld [vmem:[#allocation8 + $0x8] sm:$0xff]
    %v304 = vld [vmem:[#allocation8 + $0x10] sm:$0xff]
    %v305 = vld [vmem:[#allocation8 + $0x18] sm:$0xff]
    %v306 = vld [vmem:[#allocation8 + $0x20] sm:$0xff]
    %v307 = vld [vmem:[#allocation8 + $0x28] sm:$0xff]
    %v308 = vld [vmem:[#allocation8 + $0x30] sm:$0xff]
    %v309 = vld [vmem:[#allocation8 + $0x38] sm:$0xff]
    %v310 = vld [vmem:[#allocation8 + $0x40] sm:$0xff]
    %v311 = vld [vmem:[#allocation8 + $0x48] sm:$0xff]
    %v312 = vld [vmem:[#allocation8 + $0x50] sm:$0xff]
    %v313 = vld [vmem:[#allocation8 + $0x58] sm:$0xff]
    %v314 = vld [vmem:[#allocation8 + $0x60] sm:$0xff]
    %v315 = vld [vmem:[#allocation8 + $0x68] sm:$0xff]
    %v316 = vld [vmem:[#allocation8 + $0x70] sm:$0xff]
    %v317 = vld [vmem:[#allocation8 + $0x78] sm:$0xff]
    %v318 = vld [vmem:[%s6] sm:$0x1]
    %v320 = vlaneseq
    %v321 = vshrl.u32 %v320, 7
    %v322 = vsub.s32 0, %v321
    %v323 = vrot.slane %v318, %v322
    %325 = vmatprep.subr.mxu0 0.0
    %326 = vmatpush1.msra.mxu0 %v302
    %327 = vmatprep.subr.mxu0 0.0
    %328 = vmatpush1.msra.mxu0 %v303
    %329 = vmatprep.subr.mxu0 0.0
    %330 = vmatpush1.msra.mxu0 %v304
    %331 = vmatprep.subr.mxu0 0.0
    %332 = vmatpush1.msra.mxu0 %v305
    %333 = vmatprep.subr.mxu0 0.0
    %334 = vmatpush1.msra.mxu0 %v306
    %335 = vmatprep.subr.mxu0 0.0
    %336 = vmatpush1.msra.mxu0 %v307
    %337 = vmatprep.subr.mxu0 0.0
    %338 = vmatpush1.msra.mxu0 %v308
    %339 = vmatprep.subr.mxu0 0.0
    %340 = vmatpush1.msra.mxu0 %v309
    %341 = vmatprep.subr.mxu0 0.0
    %342 = vmatpush1.msra.mxu0 %v310
    %343 = vmatprep.subr.mxu0 0.0
    %344 = vmatpush1.msra.mxu0 %v311
    %345 = vmatprep.subr.mxu0 0.0
    %346 = vmatpush1.msra.mxu0 %v312
    %347 = vmatprep.subr.mxu0 0.0
    %348 = vmatpush1.msra.mxu0 %v313
    %349 = vmatprep.subr.mxu0 0.0
    %350 = vmatpush1.msra.mxu0 %v314
    %351 = vmatprep.subr.mxu0 0.0
    %352 = vmatpush1.msra.mxu0 %v315
    %353 = vmatprep.subr.mxu0 0.0
    %354 = vmatpush1.msra.mxu0 %v316
    %355 = vmatprep.subr.mxu0 0.0
    %356 = vmatpush1.msra.mxu0 %v317
    %357 = vmatprep.subr.mxu0 0.0
    %358 = vmatpush1.msra.mxu0 0.0
    %359 = vmatprep.subr.mxu0 0.0
    %360 = vmatpush1.msra.mxu0 0.0
    %361 = vmatprep.subr.mxu0 0.0
    %362 = vmatpush1.msra.mxu0 0.0
    %363 = vmatprep.subr.mxu0 0.0
    %364 = vmatpush1.msra.mxu0 0.0
    %365 = vmatprep.subr.mxu0 0.0
    %366 = vmatpush1.msra.mxu0 0.0
    %367 = vmatprep.subr.mxu0 0.0
    %368 = vmatpush1.msra.mxu0 0.0
    %369 = vmatprep.subr.mxu0 0.0
    %370 = vmatpush1.msra.mxu0 0.0
    %371 = vmatprep.subr.mxu0 0.0
    %372 = vmatpush1.msra.mxu0 0.0
    %373 = vmatprep.subr.mxu0 0.0
    %374 = vmatpush1.msra.mxu0 0.0
    %375 = vmatprep.subr.mxu0 0.0
    %376 = vmatpush1.msra.mxu0 0.0
    %377 = vmatprep.subr.mxu0 0.0
    %378 = vmatpush1.msra.mxu0 0.0
    %379 = vmatprep.subr.mxu0 0.0
    %380 = vmatpush1.msra.mxu0 0.0
    %381 = vmatprep.subr.mxu0 0.0
    %382 = vmatpush1.msra.mxu0 0.0
    %383 = vmatprep.subr.mxu0 0.0
    %384 = vmatpush1.msra.mxu0 0.0
    %385 = vmatprep.subr.mxu0 0.0
    %386 = vmatpush1.msra.mxu0 0.0
    %387 = vmatprep.subr.mxu0 0.0
    %388 = vmatpush1.msra.mxu0 0.0
    %389 = vmatprep.mubr.f32.mxu0 0.0
    %390 = vmatmul.mubr.f32.gmra.mrb[0].mxu0 %v300
    %v391 = vpop.f32.mrb[0].mxu0
    %v392 = vadd.f32 %v323, %v391
    %v393 = vpop.f32.mrb[0].mxu0
    %394 = vmatprep.mubr.f32.mxu0 0.0
    %395 = vmatmul.mubr.f32.gmra.mrb[0].mxu0 %v301
    %v396 = vpop.f32.mrb[0].mxu0
    %v397 = vadd.f32 %v323, %v396
    %v398 = vpop.f32.mrb[0].mxu0
    %399 = vdwg.mxu0
    %v400 = vmul.f32 %v392, 0.01
    %v401 = vmul.f32 %v397, 0.01
    %v402 = vmax.f32 %v392, %v400
    %v403 = vmax.f32 %v397, %v401
    %v404 = vld [vmem:[#allocation10] sm:$0xff]
    %v405 = vld [vmem:[#allocation10 + $0x8] sm:$0xff]
    %v406 = vld [vmem:[#allocation10 + $0x10] sm:$0xff]
    %v407 = vld [vmem:[#allocation10 + $0x18] sm:$0xff]
    %v408 = vld [vmem:[#allocation10 + $0x20] sm:$0xff]
    %v409 = vld [vmem:[#allocation10 + $0x28] sm:$0xff]
    %v410 = vld [vmem:[#allocation10 + $0x30] sm:$0xff]
    %v411 = vld [vmem:[#allocation10 + $0x38] sm:$0xff]
    %v412 = vld [vmem:[#allocation10 + $0x40] sm:$0xff]
    %v413 = vld [vmem:[#allocation10 + $0x48] sm:$0xff]
    %v414 = vld [vmem:[#allocation10 + $0x50] sm:$0xff]
    %v415 = vld [vmem:[#allocation10 + $0x58] sm:$0xff]
    %v416 = vld [vmem:[#allocation10 + $0x60] sm:$0xff]
    %v417 = vld [vmem:[#allocation10 + $0x68] sm:$0xff]
    %v418 = vld [vmem:[#allocation10 + $0x70] sm:$0xff]
    %v419 = vld [vmem:[#allocation10 + $0x78] sm:$0xff]
    %v420 = vld [vmem:[%s8] sm:$0x1]
    %v422 = vlaneseq
    %v423 = vshrl.u32 %v422, 7
    %v424 = vsub.s32 0, %v423
    %v425 = vrot.slane %v420, %v424
    %427 = vmatprep.subr.mxu0 0.0
    %428 = vmatpush1.msra.mxu0 %v404
    %429 = vmatprep.subr.mxu0 0.0
    %430 = vmatpush1.msra.mxu0 %v405
    %431 = vmatprep.subr.mxu0 0.0
    %432 = vmatpush1.msra.mxu0 %v406
    %433 = vmatprep.subr.mxu0 0.0
    %434 = vmatpush1.msra.mxu0 %v407
    %435 = vmatprep.subr.mxu0 0.0
    %436 = vmatpush1.msra.mxu0 %v408
    %437 = vmatprep.subr.mxu0 0.0
    %438 = vmatpush1.msra.mxu0 %v409
    %439 = vmatprep.subr.mxu0 0.0
    %440 = vmatpush1.msra.mxu0 %v410
    %441 = vmatprep.subr.mxu0 0.0
    %442 = vmatpush1.msra.mxu0 %v411
    %443 = vmatprep.subr.mxu0 0.0
    %444 = vmatpush1.msra.mxu0 %v412
    %445 = vmatprep.subr.mxu0 0.0
    %446 = vmatpush1.msra.mxu0 %v413
    %447 = vmatprep.subr.mxu0 0.0
    %448 = vmatpush1.msra.mxu0 %v414
    %449 = vmatprep.subr.mxu0 0.0
    %450 = vmatpush1.msra.mxu0 %v415
    %451 = vmatprep.subr.mxu0 0.0
    %452 = vmatpush1.msra.mxu0 %v416
    %453 = vmatprep.subr.mxu0 0.0
    %454 = vmatpush1.msra.mxu0 %v417
    %455 = vmatprep.subr.mxu0 0.0
    %456 = vmatpush1.msra.mxu0 %v418
    %457 = vmatprep.subr.mxu0 0.0
    %458 = vmatpush1.msra.mxu0 %v419
    %459 = vmatprep.subr.mxu0 0.0
    %460 = vmatpush1.msra.mxu0 0.0
    %461 = vmatprep.subr.mxu0 0.0
    %462 = vmatpush1.msra.mxu0 0.0
    %463 = vmatprep.subr.mxu0 0.0
    %464 = vmatpush1.msra.mxu0 0.0
    %465 = vmatprep.subr.mxu0 0.0
    %466 = vmatpush1.msra.mxu0 0.0
    %467 = vmatprep.subr.mxu0 0.0
    %468 = vmatpush1.msra.mxu0 0.0
    %469 = vmatprep.subr.mxu0 0.0
    %470 = vmatpush1.msra.mxu0 0.0
    %471 = vmatprep.subr.mxu0 0.0
    %472 = vmatpush1.msra.mxu0 0.0
    %473 = vmatprep.subr.mxu0 0.0
    %474 = vmatpush1.msra.mxu0 0.0
    %475 = vmatprep.subr.mxu0 0.0
    %476 = vmatpush1.msra.mxu0 0.0
    %477 = vmatprep.subr.mxu0 0.0
    %478 = vmatpush1.msra.mxu0 0.0
    %479 = vmatprep.subr.mxu0 0.0
    %480 = vmatpush1.msra.mxu0 0.0
    %481 = vmatprep.subr.mxu0 0.0
    %482 = vmatpush1.msra.mxu0 0.0
    %483 = vmatprep.subr.mxu0 0.0
    %484 = vmatpush1.msra.mxu0 0.0
    %485 = vmatprep.subr.mxu0 0.0
    %486 = vmatpush1.msra.mxu0 0.0
    %487 = vmatprep.subr.mxu0 0.0
    %488 = vmatpush1.msra.mxu0 0.0
    %489 = vmatprep.subr.mxu0 0.0
    %490 = vmatpush1.msra.mxu0 0.0
    %491 = vmatprep.mubr.f32.mxu0 0.0
    %492 = vmatmul.mubr.f32.gmra.mrb[0].mxu0 %v402
    %v493 = vpop.f32.mrb[0].mxu0
    %v494 = vadd.f32 %v425, %v493
    %v495 = vpop.f32.mrb[0].mxu0
    %496 = vmatprep.mubr.f32.mxu0 0.0
    %497 = vmatmul.mubr.f32.gmra.mrb[0].mxu0 %v403
    %v498 = vpop.f32.mrb[0].mxu0
    %v499 = vadd.f32 %v425, %v498
    %v500 = vpop.f32.mrb[0].mxu0
    %501 = vdwg.mxu0
    %v502 = vmul.f32 %v494, 0.01
    %v503 = vmul.f32 %v499, 0.01
    %v504 = vmax.f32 %v494, %v502
    %v505 = vmax.f32 %v499, %v503
    %506 = vst [vmem:[#allocation11] sm:$0xff] %v504
    %507 = vst [vmem:[#allocation11 + $0x8] sm:$0xff] %v505
    // Predicated region
    $region58: #{tpu_custom_call.1} parent=1 // pred_check
      _
    $region59: #{tpu_custom_call.1} parent=1 // pred_check_branch
      %509 = sbr.rel (0) target = $region61
    $region60: #{tpu_custom_call.1} parent=1 // pred_region
      %s511 = ssub.s32 256, 256
      %512 = vsyncadd [#allocation4], %s511
      %s513 = sshll.u32 [#allocation11], 4
      %s514 = int_to_ptr.vmem [resolvable:$true] %s513
      %519 = dma.vmem_to_hbm [thread:$0]  %s514, 256, %s9, [#allocation4], 128, 128, 8
    $region61: #{tpu_custom_call.1} parent=1 // pred_fallthru
      _
    // Predicated region
    $region62: #{tpu_custom_call.1} parent=1 // pred_check
      _
    $region63: #{tpu_custom_call.1} parent=1 // pred_check_branch
      %521 = sbr.rel (0) target = $region65
    $region64: #{tpu_custom_call.1} parent=1 // pred_region
      %522 = dma.done [#allocation4], 256
    $region65: #{tpu_custom_call.1} parent=1 // pred_fallthru
      _
    %523 = vsyncpa [#allocation3], 1
    %524 = vsyncpa [#allocation6], 1
    %525 = vsyncpa [#allocation9], 1
    %526 = vsyncpa [#allocation4], 1

// kernel: tpu_custom_call.1
$region0: #{tpu_custom_call.1}
  #allocation0 [shape = 'u32[]', space=smem, size = 0x4, offset = 0x4, fixed_abs, tag = 'smem constant byte address 0x4 - core index']
  #allocation1 [shape = 'u32[144,128]{1,0:T(1,128)}', space=vmem, size = 0x12000, scoped, tag = 'internal scratch']
  %s0 = inlined_call_operand.hbm [shape: f32[16,32], index: 0, kind: input, shape index: {}]
  %s1 = inlined_call_operand.hbm [shape: f32[32,128], index: 1, kind: input, shape index: {}]
  %s2 = inlined_call_operand.vmem [shape: f32[1,128], index: 2, kind: input, shape index: {}]
  %s3 = inlined_call_operand.hbm [shape: f32[128,128], index: 3, kind: input, shape index: {}]
  %s4 = inlined_call_operand.vmem [shape: f32[1,128], index: 4, kind: input, shape index: {}]
  %s5 = inlined_call_operand.hbm [shape: f32[128,128], index: 5, kind: input, shape index: {}]
  %s6 = inlined_call_operand.vmem [shape: f32[1,128], index: 6, kind: input, shape index: {}]
  %s7 = inlined_call_operand.hbm [shape: f32[128,128], index: 7, kind: input, shape index: {}]
  %s8 = inlined_call_operand.vmem [shape: f32[1,128], index: 8, kind: input, shape index: {}]
  %s9 = inlined_call_operand.hbm [shape: f32[16,128], index: 9, kind: output, shape index: {}]
  %s10 = sld [smem:[#allocation0]]
  $region66: #{tpu_custom_call.1} parent=0
    _
  %s12 = ssub.s32 1, %s10
  %s13 = scalar_select 0, %s12, %s10
  $region1: #{tpu_custom_call.1} parent=0
    #allocation2 [shape = 'u8[8192]{0}', space=vmem, size = 0x2000, scoped, tag = 'input window, operand 0, single buffered']
    #allocation3 [shape = 's32[1]{0}', space=sflag, size = 0x4, scoped, tag = 'scoped memory for tpu_custom_call.1']
    #allocation4 [shape = 's32[1]{0}', space=sflag, size = 0x4, scoped, tag = 'scoped memory for tpu_custom_call.1']
    #allocation5 [shape = 'u8[16384]{0}', space=vmem, size = 0x4000, scoped, tag = 'input window, operand 1, single buffered']
    #allocation6 [shape = 's32[1]{0}', space=sflag, size = 0x4, scoped, tag = 'scoped memory for tpu_custom_call.1']
    #allocation7 [shape = 'u8[65536]{0}', space=vmem, size = 0x10000, scoped, tag = 'input window, operand 3, single buffered']
    #allocation8 [shape = 'u8[65536]{0}', space=vmem, size = 0x10000, scoped, tag = 'input window, operand 5, single buffered']
    #allocation9 [shape = 's32[1]{0}', space=sflag, size = 0x4, scoped, tag = 'scoped memory for tpu_custom_call.1']
    #allocation10 [shape = 'u8[65536]{0}', space=vmem, size = 0x10000, scoped, tag = 'input window, operand 7, single buffered']
    #allocation11 [shape = 'u8[8192]{0}', space=vmem, size = 0x2000, scoped, tag = 'output window, operand 0, single buffered']
    %14 = vsyncpa [#allocation3], 0
    %15 = vsyncpa [#allocation6], 0
    %16 = vsyncpa [#allocation9], 0
    %17 = vsyncpa [#allocation4], 0
    // Predicated region
    $region2: #{tpu_custom_call.1} parent=1 // pred_check
      _
    $region3: #{tpu_custom_call.1} parent=1 // pred_check_branch
      %19 = sbr.rel (0) target = $region5
    $region4: #{tpu_custom_call.1} parent=1 // pred_region
      %s21 = ssub.s32 256, 256
      %22 = vsyncadd [#allocation3], %s21
      %s23 = sshll.u32 [#allocation2], 4
      %s24 = int_to_ptr.vmem [resolvable:$true] %s23
      %29 = dma.hbm_to_vmem [thread:$0]  %s0, 256, %s24, [#allocation3], 128, 128, 8
    $region5: #{tpu_custom_call.1} parent=1 // pred_fallthru
      _
    // Predicated region
    $region6: #{tpu_custom_call.1} parent=1 // pred_check
      _
    $region7: #{tpu_custom_call.1} parent=1 // pred_check_branch
      %31 = sbr.rel (0) target = $region9
    $region8: #{tpu_custom_call.1} parent=1 // pred_region
      %s33 = ssub.s32 512, 512
      %34 = vsyncadd [#allocation6], %s33
      %s35 = sshll.u32 [#allocation5], 4
      %s36 = int_to_ptr.vmem [resolvable:$true] %s35
      %41 = dma.hbm_to_vmem [thread:$0]  %s1, 512, %s36, [#allocation6], 128, 128, 8
    $region9: #{tpu_custom_call.1} parent=1 // pred_fallthru
      _
    // Predicated region
    $region10: #{tpu_custom_call.1} parent=1 // pred_check
      _
    $region11: #{tpu_custom_call.1} parent=1 // pred_check_branch
      %43 = sbr.rel (0) target = $region13
    $region12: #{tpu_custom_call.1} parent=1 // pred_region
      _
    $region13: #{tpu_custom_call.1} parent=1 // pred_fallthru
      _
    // Predicated region
    $region14: #{tpu_custom_call.1} parent=1 // pred_check
      _
    $region15: #{tpu_custom_call.1} parent=1 // pred_check_branch
      %45 = sbr.rel (0) target = $region17
    $region16: #{tpu_custom_call.1} parent=1 // pred_region
      %s47 = ssub.s32 2048, 2048
      %48 = vsyncadd [#allocation6], %s47
      %s49 = sshll.u32 [#allocation7], 4
      %s50 = int_to_ptr.vmem [resolvable:$true] %s49
      %55 = dma.hbm_to_vmem [thread:$0]  %s3, 2048, %s50, [#allocation6], 128, 128, 8
    $region17: #{tpu_custom_call.1} parent=1 // pred_fallthru
      _
    // Predicated region
    $region18: #{tpu_custom_call.1} parent=1 // pred_check
      _
    $region19: #{tpu_custom_call.1} parent=1 // pred_check_branch
      %57 = sbr.rel (0) target = $region21
    $region20: #{tpu_custom_call.1} parent=1 // pred_region
      _
    $region21: #{tpu_custom_call.1} parent=1 // pred_fallthru
      _
    // Predicated region
    $region22: #{tpu_custom_call.1} parent=1 // pred_check
      _
    $region23: #{tpu_custom_call.1} parent=1 // pred_check_branch
      %59 = sbr.rel (0) target = $region25
    $region24: #{tpu_custom_call.1} parent=1 // pred_region
      %s61 = ssub.s32 2048, 2048
      %62 = vsyncadd [#allocation9], %s61
      %s63 = sshll.u32 [#allocation8], 4
      %s64 = int_to_ptr.vmem [resolvable:$true] %s63
      %69 = dma.hbm_to_vmem [thread:$0]  %s5, 2048, %s64, [#allocation9], 128, 128, 8
    $region25: #{tpu_custom_call.1} parent=1 // pred_fallthru
      _
    // Predicated region
    $region26: #{tpu_custom_call.1} parent=1 // pred_check
      _
    $region27: #{tpu_custom_call.1} parent=1 // pred_check_branch
      %71 = sbr.rel (0) target = $region29
    $region28: #{tpu_custom_call.1} parent=1 // pred_region
      _
    $region29: #{tpu_custom_call.1} parent=1 // pred_fallthru
      _
    // Predicated region
    $region30: #{tpu_custom_call.1} parent=1 // pred_check
      _
    $region31: #{tpu_custom_call.1} parent=1 // pred_check_branch
      %73 = sbr.rel (0) target = $region33
    $region32: #{tpu_custom_call.1} parent=1 // pred_region
      %s75 = ssub.s32 2048, 2048
      %76 = vsyncadd [#allocation9], %s75
      %s77 = sshll.u32 [#allocation10], 4
      %s78 = int_to_ptr.vmem [resolvable:$true] %s77
      %83 = dma.hbm_to_vmem [thread:$0]  %s7, 2048, %s78, [#allocation9], 128, 128, 8
    $region33: #{tpu_custom_call.1} parent=1 // pred_fallthru
      _
    // Predicated region
    $region34: #{tpu_custom_call.1} parent=1 // pred_check
      _
    $region35: #{tpu_custom_call.1} parent=1 // pred_check_branch
      %85 = sbr.rel (0) target = $region37
    $region36: #{tpu_custom_call.1} parent=1 // pred_region
      _
    $region37: #{tpu_custom_call.1} parent=1 // pred_fallthru
      _
    // Predicated region
    $region38: #{tpu_custom_call.1} parent=1 // pred_check
      _
    $region39: #{tpu_custom_call.1} parent=1 // pred_check_branch
      %87 = sbr.rel (0) target = $region41
    $region40: #{tpu_custom_call.1} parent=1 // pred_region
      %88 = dma.done [#allocation3], 256
    $region41: #{tpu_custom_call.1} parent=1 // pred_fallthru
      _
    // Predicated region
    $region42: #{tpu_custom_call.1} parent=1 // pred_check
      _
    $region43: #{tpu_custom_call.1} parent=1 // pred_check_branch
      %90 = sbr.rel (0) target = $region45
    $region44: #{tpu_custom_call.1} parent=1 // pred_region
      %91 = dma.done [#allocation6], 512
    $region45: #{tpu_custom_call.1} parent=1 // pred_fallthru
      _
    // Predicated region
    $region46: #{tpu_custom_call.1} parent=1 // pred_check
      _
    $region47: #{tpu_custom_call.1} parent=1 // pred_check_branch
      %93 = sbr.rel (0) target = $region49
    $region48: #{tpu_custom_call.1} parent=1 // pred_region
      %94 = dma.done [#allocation6], 2048
    $region49: #{tpu_custom_call.1} parent=1 // pred_fallthru
      _
    // Predicated region
    $region50: #{tpu_custom_call.1} parent=1 // pred_check
      _
    $region51: #{tpu_custom_call.1} parent=1 // pred_check_branch
      %96 = sbr.rel (0) target = $region53
    $region52: #{tpu_custom_call.1} parent=1 // pred_region
      %97 = dma.done [#allocation9], 2048
    $region53: #{tpu_custom_call.1} parent=1 // pred_fallthru
      _
    // Predicated region
    $region54: #{tpu_custom_call.1} parent=1 // pred_check
      _
    $region55: #{tpu_custom_call.1} parent=1 // pred_check_branch
      %99 = sbr.rel (0) target = $region57
    $region56: #{tpu_custom_call.1} parent=1 // pred_region
      %100 = dma.done [#allocation9], 2048
    $region57: #{tpu_custom_call.1} parent=1 // pred_fallthru
      _
    %v101 = vld [vmem:[#allocation2] sm:$0xff]
    %v102 = vld [vmem:[#allocation2 + $0x8] sm:$0xff]
    %v103 = vld [vmem:[#allocation5] sm:$0xff]
    %v104 = vld [vmem:[#allocation5 + $0x8] sm:$0xff]
    %v105 = vld [vmem:[#allocation5 + $0x10] sm:$0xff]
    %v106 = vld [vmem:[#allocation5 + $0x18] sm:$0xff]
    %v107 = vld [vmem:[%s2] sm:$0x1]
    %v109 = vlaneseq
    %v110 = vshrl.u32 %v109, 7
    %v111 = vsub.s32 0, %v110
    %v112 = vrot.slane %v107, %v111
    %vm114 = vcmask 261120
    %v116 = vsel %vm114, %v101, 0
    %v119 = vsel %vm114, %v102, 0
    %121 = vmatprep.subr.mxu0 0.0
    %122 = vmatpush1.msra.mxu0 %v103
    %123 = vmatprep.subr.mxu0 0.0
    %124 = vmatpush1.msra.mxu0 %v104
    %125 = vmatprep.subr.mxu0 0.0
    %126 = vmatpush1.msra.mxu0 %v105
    %127 = vmatprep.subr.mxu0 0.0
    %128 = vmatpush1.msra.mxu0 %v106
    %129 = vmatprep.subr.mxu0 0.0
    %130 = vmatpush1.msra.mxu0 0.0
    %131 = vmatprep.subr.mxu0 0.0
    %132 = vmatpush1.msra.mxu0 0.0
    %133 = vmatprep.subr.mxu0 0.0
    %134 = vmatpush1.msra.mxu0 0.0
    %135 = vmatprep.subr.mxu0 0.0
    %136 = vmatpush1.msra.mxu0 0.0
    %137 = vmatprep.subr.mxu0 0.0
    %138 = vmatpush1.msra.mxu0 0.0
    %139 = vmatprep.subr.mxu0 0.0
    %140 = vmatpush1.msra.mxu0 0.0
    %141 = vmatprep.subr.mxu0 0.0
    %142 = vmatpush1.msra.mxu0 0.0
    %143 = vmatprep.subr.mxu0 0.0
    %144 = vmatpush1.msra.mxu0 0.0
    %145 = vmatprep.subr.mxu0 0.0
    %146 = vmatpush1.msra.mxu0 0.0
    %147 = vmatprep.subr.mxu0 0.0
    %148 = vmatpush1.msra.mxu0 0.0
    %149 = vmatprep.subr.mxu0 0.0
    %150 = vmatpush1.msra.mxu0 0.0
    %151 = vmatprep.subr.mxu0 0.0
    %152 = vmatpush1.msra.mxu0 0.0
    %153 = vmatprep.subr.mxu0 0.0
    %154 = vmatpush1.msra.mxu0 0.0
    %155 = vmatprep.subr.mxu0 0.0
    %156 = vmatpush1.msra.mxu0 0.0
    %157 = vmatprep.subr.mxu0 0.0
    %158 = vmatpush1.msra.mxu0 0.0
    %159 = vmatprep.subr.mxu0 0.0
    %160 = vmatpush1.msra.mxu0 0.0
    %161 = vmatprep.subr.mxu0 0.0
    %162 = vmatpush1.msra.mxu0 0.0
    %163 = vmatprep.subr.mxu0 0.0
    %164 = vmatpush1.msra.mxu0 0.0
    %165 = vmatprep.subr.mxu0 0.0
    %166 = vmatpush1.msra.mxu0 0.0
    %167 = vmatprep.subr.mxu0 0.0
    %168 = vmatpush1.msra.mxu0 0.0
    %169 = vmatprep.subr.mxu0 0.0
    %170 = vmatpush1.msra.mxu0 0.0
    %171 = vmatprep.subr.mxu0 0.0
    %172 = vmatpush1.msra.mxu0 0.0
    %173 = vmatprep.subr.mxu0 0.0
    %174 = vmatpush1.msra.mxu0 0.0
    %175 = vmatprep.subr.mxu0 0.0
    %176 = vmatpush1.msra.mxu0 0.0
    %177 = vmatprep.subr.mxu0 0.0
    %178 = vmatpush1.msra.mxu0 0.0
    %179 = vmatprep.subr.mxu0 0.0
    %180 = vmatpush1.msra.mxu0 0.0
    %181 = vmatprep.subr.mxu0 0.0
    %182 = vmatpush1.msra.mxu0 0.0
    %183 = vmatprep.subr.mxu0 0.0
    %184 = vmatpush1.msra.mxu0 0.0
    %185 = vmatprep.mubr.f32.mxu0 0.0
    %186 = vmatmul.mubr.f32.gmra.mrb[0].mxu0 %v116
    %v187 = vpop.f32.mrb[0].mxu0
    %v188 = vadd.f32 %v112, %v187
    %v189 = vpop.f32.mrb[0].mxu0
    %190 = vmatprep.mubr.f32.mxu0 0.0
    %191 = vmatmul.mubr.f32.gmra.mrb[0].mxu0 %v119
    %v192 = vpop.f32.mrb[0].mxu0
    %v193 = vadd.f32 %v112, %v192
    %v194 = vpop.f32.mrb[0].mxu0
    %195 = vdwg.mxu0
    %v196 = vmul.f32 %v188, 0.01
    %v197 = vmul.f32 %v193, 0.01
    %v198 = vmax.f32 %v188, %v196
    %v199 = vmax.f32 %v193, %v197
    %v200 = vld [vmem:[#allocation7] sm:$0xff]
    %v201 = vld [vmem:[#allocation7 + $0x8] sm:$0xff]
    %v202 = vld [vmem:[#allocation7 + $0x10] sm:$0xff]
    %v203 = vld [vmem:[#allocation7 + $0x18] sm:$0xff]
    %v204 = vld [vmem:[#allocation7 + $0x20] sm:$0xff]
    %v205 = vld [vmem:[#allocation7 + $0x28] sm:$0xff]
    %v206 = vld [vmem:[#allocation7 + $0x30] sm:$0xff]
    %v207 = vld [vmem:[#allocation7 + $0x38] sm:$0xff]
    %v208 = vld [vmem:[#allocation7 + $0x40] sm:$0xff]
    %v209 = vld [vmem:[#allocation7 + $0x48] sm:$0xff]
    %v210 = vld [vmem:[#allocation7 + $0x50] sm:$0xff]
    %v211 = vld [vmem:[#allocation7 + $0x58] sm:$0xff]
    %v212 = vld [vmem:[#allocation7 + $0x60] sm:$0xff]
    %v213 = vld [vmem:[#allocation7 + $0x68] sm:$0xff]
    %v214 = vld [vmem:[#allocation7 + $0x70] sm:$0xff]
    %v215 = vld [vmem:[#allocation7 + $0x78] sm:$0xff]
    %v216 = vld [vmem:[%s4] sm:$0x1]
    %v218 = vlaneseq
    %v219 = vshrl.u32 %v218, 7
    %v220 = vsub.s32 0, %v219
    %v221 = vrot.slane %v216, %v220
    %223 = vmatprep.subr.mxu0 0.0
    %224 = vmatpush1.msra.mxu0 %v200
    %225 = vmatprep.subr.mxu0 0.0
    %226 = vmatpush1.msra.mxu0 %v201
    %227 = vmatprep.subr.mxu0 0.0
    %228 = vmatpush1.msra.mxu0 %v202
    %229 = vmatprep.subr.mxu0 0.0
    %230 = vmatpush1.msra.mxu0 %v203
    %231 = vmatprep.subr.mxu0 0.0
    %232 = vmatpush1.msra.mxu0 %v204
    %233 = vmatprep.subr.mxu0 0.0
    %234 = vmatpush1.msra.mxu0 %v205
    %235 = vmatprep.subr.mxu0 0.0
    %236 = vmatpush1.msra.mxu0 %v206
    %237 = vmatprep.subr.mxu0 0.0
    %238 = vmatpush1.msra.mxu0 %v207
    %239 = vmatprep.subr.mxu0 0.0
    %240 = vmatpush1.msra.mxu0 %v208
    %241 = vmatprep.subr.mxu0 0.0
    %242 = vmatpush1.msra.mxu0 %v209
    %243 = vmatprep.subr.mxu0 0.0
    %244 = vmatpush1.msra.mxu0 %v210
    %245 = vmatprep.subr.mxu0 0.0
    %246 = vmatpush1.msra.mxu0 %v211
    %247 = vmatprep.subr.mxu0 0.0
    %248 = vmatpush1.msra.mxu0 %v212
    %249 = vmatprep.subr.mxu0 0.0
    %250 = vmatpush1.msra.mxu0 %v213
    %251 = vmatprep.subr.mxu0 0.0
    %252 = vmatpush1.msra.mxu0 %v214
    %253 = vmatprep.subr.mxu0 0.0
    %254 = vmatpush1.msra.mxu0 %v215
    %255 = vmatprep.subr.mxu0 0.0
    %256 = vmatpush1.msra.mxu0 0.0
    %257 = vmatprep.subr.mxu0 0.0
    %258 = vmatpush1.msra.mxu0 0.0
    %259 = vmatprep.subr.mxu0 0.0
    %260 = vmatpush1.msra.mxu0 0.0
    %261 = vmatprep.subr.mxu0 0.0
    %262 = vmatpush1.msra.mxu0 0.0
    %263 = vmatprep.subr.mxu0 0.0
    %264 = vmatpush1.msra.mxu0 0.0
    %265 = vmatprep.subr.mxu0 0.0
    %266 = vmatpush1.msra.mxu0 0.0
    %267 = vmatprep.subr.mxu0 0.0
    %268 = vmatpush1.msra.mxu0 0.0
    %269 = vmatprep.subr.mxu0 0.0
    %270 = vmatpush1.msra.mxu0 0.0
    %271 = vmatprep.subr.mxu0 0.0
    %272 = vmatpush1.msra.mxu0 0.0
    %273 = vmatprep.subr.mxu0 0.0
    %274 = vmatpush1.msra.mxu0 0.0
    %275 = vmatprep.subr.mxu0 0.0
    %276 = vmatpush1.msra.mxu0 0.0
    %277 = vmatprep.subr.mxu0 0.0
    %278 = vmatpush1.msra.mxu0 0.0
    %279 = vmatprep.subr.mxu0 0.0
    %280 = vmatpush1.msra.mxu0 0.0
    %281 = vmatprep.subr.mxu0 0.0
    %282 = vmatpush1.msra.mxu0 0.0
    %283 = vmatprep.subr.mxu0 0.0
    %284 = vmatpush1.msra.mxu0 0.0
    %285 = vmatprep.subr.mxu0 0.0
    %286 = vmatpush1.msra.mxu0 0.0
    %287 = vmatprep.mubr.f32.mxu0 0.0
    %288 = vmatmul.mubr.f32.gmra.mrb[0].mxu0 %v198
    %v289 = vpop.f32.mrb[0].mxu0
    %v290 = vadd.f32 %v221, %v289
    %v291 = vpop.f32.mrb[0].mxu0
    %292 = vmatprep.mubr.f32.mxu0 0.0
    %293 = vmatmul.mubr.f32.gmra.mrb[0].mxu0 %v199
    %v294 = vpop.f32.mrb[0].mxu0
    %v295 = vadd.f32 %v221, %v294
    %v296 = vpop.f32.mrb[0].mxu0
    %297 = vdwg.mxu0
    %v298 = vmul.f32 %v290, 0.01
    %v299 = vmul.f32 %v295, 0.01
    %v300 = vmax.f32 %v290, %v298
    %v301 = vmax.f32 %v295, %v299
    %v302 = vld [vmem:[#allocation8] sm:$0xff]
    %v303 = vld [vmem:[#allocation8 + $0x8] sm:$0xff]
    %v304 = vld [vmem:[#allocation8 + $0x10] sm:$0xff]
    %v305 = vld [vmem:[#allocation8 + $0x18] sm:$0xff]
    %v306 = vld [vmem:[#allocation8 + $0x20] sm:$0xff]
    %v307 = vld [vmem:[#allocation8 + $0x28] sm:$0xff]
    %v308 = vld [vmem:[#allocation8 + $0x30] sm:$0xff]
    %v309 = vld [vmem:[#allocation8 + $0x38] sm:$0xff]
    %v310 = vld [vmem:[#allocation8 + $0x40] sm:$0xff]
    %v311 = vld [vmem:[#allocation8 + $0x48] sm:$0xff]
    %v312 = vld [vmem:[#allocation8 + $0x50] sm:$0xff]
    %v313 = vld [vmem:[#allocation8 + $0x58] sm:$0xff]
    %v314 = vld [vmem:[#allocation8 + $0x60] sm:$0xff]
    %v315 = vld [vmem:[#allocation8 + $0x68] sm:$0xff]
    %v316 = vld [vmem:[#allocation8 + $0x70] sm:$0xff]
    %v317 = vld [vmem:[#allocation8 + $0x78] sm:$0xff]
    %v318 = vld [vmem:[%s6] sm:$0x1]
    %v320 = vlaneseq
    %v321 = vshrl.u32 %v320, 7
    %v322 = vsub.s32 0, %v321
    %v323 = vrot.slane %v318, %v322
    %325 = vmatprep.subr.mxu0 0.0
    %326 = vmatpush1.msra.mxu0 %v302
    %327 = vmatprep.subr.mxu0 0.0
    %328 = vmatpush1.msra.mxu0 %v303
    %329 = vmatprep.subr.mxu0 0.0
    %330 = vmatpush1.msra.mxu0 %v304
    %331 = vmatprep.subr.mxu0 0.0
    %332 = vmatpush1.msra.mxu0 %v305
    %333 = vmatprep.subr.mxu0 0.0
    %334 = vmatpush1.msra.mxu0 %v306
    %335 = vmatprep.subr.mxu0 0.0
    %336 = vmatpush1.msra.mxu0 %v307
    %337 = vmatprep.subr.mxu0 0.0
    %338 = vmatpush1.msra.mxu0 %v308
    %339 = vmatprep.subr.mxu0 0.0
    %340 = vmatpush1.msra.mxu0 %v309
    %341 = vmatprep.subr.mxu0 0.0
    %342 = vmatpush1.msra.mxu0 %v310
    %343 = vmatprep.subr.mxu0 0.0
    %344 = vmatpush1.msra.mxu0 %v311
    %345 = vmatprep.subr.mxu0 0.0
    %346 = vmatpush1.msra.mxu0 %v312
    %347 = vmatprep.subr.mxu0 0.0
    %348 = vmatpush1.msra.mxu0 %v313
    %349 = vmatprep.subr.mxu0 0.0
    %350 = vmatpush1.msra.mxu0 %v314
    %351 = vmatprep.subr.mxu0 0.0
    %352 = vmatpush1.msra.mxu0 %v315
    %353 = vmatprep.subr.mxu0 0.0
    %354 = vmatpush1.msra.mxu0 %v316
    %355 = vmatprep.subr.mxu0 0.0
    %356 = vmatpush1.msra.mxu0 %v317
    %357 = vmatprep.subr.mxu0 0.0
    %358 = vmatpush1.msra.mxu0 0.0
    %359 = vmatprep.subr.mxu0 0.0
    %360 = vmatpush1.msra.mxu0 0.0
    %361 = vmatprep.subr.mxu0 0.0
    %362 = vmatpush1.msra.mxu0 0.0
    %363 = vmatprep.subr.mxu0 0.0
    %364 = vmatpush1.msra.mxu0 0.0
    %365 = vmatprep.subr.mxu0 0.0
    %366 = vmatpush1.msra.mxu0 0.0
    %367 = vmatprep.subr.mxu0 0.0
    %368 = vmatpush1.msra.mxu0 0.0
    %369 = vmatprep.subr.mxu0 0.0
    %370 = vmatpush1.msra.mxu0 0.0
    %371 = vmatprep.subr.mxu0 0.0
    %372 = vmatpush1.msra.mxu0 0.0
    %373 = vmatprep.subr.mxu0 0.0
    %374 = vmatpush1.msra.mxu0 0.0
    %375 = vmatprep.subr.mxu0 0.0
    %376 = vmatpush1.msra.mxu0 0.0
    %377 = vmatprep.subr.mxu0 0.0
    %378 = vmatpush1.msra.mxu0 0.0
    %379 = vmatprep.subr.mxu0 0.0
    %380 = vmatpush1.msra.mxu0 0.0
    %381 = vmatprep.subr.mxu0 0.0
    %382 = vmatpush1.msra.mxu0 0.0
    %383 = vmatprep.subr.mxu0 0.0
    %384 = vmatpush1.msra.mxu0 0.0
    %385 = vmatprep.subr.mxu0 0.0
    %386 = vmatpush1.msra.mxu0 0.0
    %387 = vmatprep.subr.mxu0 0.0
    %388 = vmatpush1.msra.mxu0 0.0
    %389 = vmatprep.mubr.f32.mxu0 0.0
    %390 = vmatmul.mubr.f32.gmra.mrb[0].mxu0 %v300
    %v391 = vpop.f32.mrb[0].mxu0
    %v392 = vadd.f32 %v323, %v391
    %v393 = vpop.f32.mrb[0].mxu0
    %394 = vmatprep.mubr.f32.mxu0 0.0
    %395 = vmatmul.mubr.f32.gmra.mrb[0].mxu0 %v301
    %v396 = vpop.f32.mrb[0].mxu0
    %v397 = vadd.f32 %v323, %v396
    %v398 = vpop.f32.mrb[0].mxu0
    %399 = vdwg.mxu0
    %v400 = vmul.f32 %v392, 0.01
    %v401 = vmul.f32 %v397, 0.01
    %v402 = vmax.f32 %v392, %v400
    %v403 = vmax.f32 %v397, %v401
    %v404 = vld [vmem:[#allocation10] sm:$0xff]
    %v405 = vld [vmem:[#allocation10 + $0x8] sm:$0xff]
    %v406 = vld [vmem:[#allocation10 + $0x10] sm:$0xff]
    %v407 = vld [vmem:[#allocation10 + $0x18] sm:$0xff]
    %v408 = vld [vmem:[#allocation10 + $0x20] sm:$0xff]
    %v409 = vld [vmem:[#allocation10 + $0x28] sm:$0xff]
    %v410 = vld [vmem:[#allocation10 + $0x30] sm:$0xff]
    %v411 = vld [vmem:[#allocation10 + $0x38] sm:$0xff]
    %v412 = vld [vmem:[#allocation10 + $0x40] sm:$0xff]
    %v413 = vld [vmem:[#allocation10 + $0x48] sm:$0xff]
    %v414 = vld [vmem:[#allocation10 + $0x50] sm:$0xff]
    %v415 = vld [vmem:[#allocation10 + $0x58] sm:$0xff]
    %v416 = vld [vmem:[#allocation10 + $0x60] sm:$0xff]
    %v417 = vld [vmem:[#allocation10 + $0x68] sm:$0xff]
    %v418 = vld [vmem:[#allocation10 + $0x70] sm:$0xff]
    %v419 = vld [vmem:[#allocation10 + $0x78] sm:$0xff]
    %v420 = vld [vmem:[%s8] sm:$0x1]
    %v422 = vlaneseq
    %v423 = vshrl.u32 %v422, 7
    %v424 = vsub.s32 0, %v423
    %v425 = vrot.slane %v420, %v424
    %427 = vmatprep.subr.mxu0 0.0
    %428 = vmatpush1.msra.mxu0 %v404
    %429 = vmatprep.subr.mxu0 0.0
    %430 = vmatpush1.msra.mxu0 %v405
    %431 = vmatprep.subr.mxu0 0.0
    %432 = vmatpush1.msra.mxu0 %v406
    %433 = vmatprep.subr.mxu0 0.0
    %434 = vmatpush1.msra.mxu0 %v407
    %435 = vmatprep.subr.mxu0 0.0
    %436 = vmatpush1.msra.mxu0 %v408
    %437 = vmatprep.subr.mxu0 0.0
    %438 = vmatpush1.msra.mxu0 %v409
    %439 = vmatprep.subr.mxu0 0.0
    %440 = vmatpush1.msra.mxu0 %v410
    %441 = vmatprep.subr.mxu0 0.0
    %442 = vmatpush1.msra.mxu0 %v411
    %443 = vmatprep.subr.mxu0 0.0
    %444 = vmatpush1.msra.mxu0 %v412
    %445 = vmatprep.subr.mxu0 0.0
    %446 = vmatpush1.msra.mxu0 %v413
    %447 = vmatprep.subr.mxu0 0.0
    %448 = vmatpush1.msra.mxu0 %v414
    %449 = vmatprep.subr.mxu0 0.0
    %450 = vmatpush1.msra.mxu0 %v415
    %451 = vmatprep.subr.mxu0 0.0
    %452 = vmatpush1.msra.mxu0 %v416
    %453 = vmatprep.subr.mxu0 0.0
    %454 = vmatpush1.msra.mxu0 %v417
    %455 = vmatprep.subr.mxu0 0.0
    %456 = vmatpush1.msra.mxu0 %v418
    %457 = vmatprep.subr.mxu0 0.0
    %458 = vmatpush1.msra.mxu0 %v419
    %459 = vmatprep.subr.mxu0 0.0
    %460 = vmatpush1.msra.mxu0 0.0
    %461 = vmatprep.subr.mxu0 0.0
    %462 = vmatpush1.msra.mxu0 0.0
    %463 = vmatprep.subr.mxu0 0.0
    %464 = vmatpush1.msra.mxu0 0.0
    %465 = vmatprep.subr.mxu0 0.0
    %466 = vmatpush1.msra.mxu0 0.0
    %467 = vmatprep.subr.mxu0 0.0
    %468 = vmatpush1.msra.mxu0 0.0
    %469 = vmatprep.subr.mxu0 0.0
    %470 = vmatpush1.msra.mxu0 0.0
    %471 = vmatprep.subr.mxu0 0.0
    %472 = vmatpush1.msra.mxu0 0.0
    %473 = vmatprep.subr.mxu0 0.0
    %474 = vmatpush1.msra.mxu0 0.0
    %475 = vmatprep.subr.mxu0 0.0
    %476 = vmatpush1.msra.mxu0 0.0
    %477 = vmatprep.subr.mxu0 0.0
    %478 = vmatpush1.msra.mxu0 0.0
    %479 = vmatprep.subr.mxu0 0.0
    %480 = vmatpush1.msra.mxu0 0.0
    %481 = vmatprep.subr.mxu0 0.0
    %482 = vmatpush1.msra.mxu0 0.0
    %483 = vmatprep.subr.mxu0 0.0
    %484 = vmatpush1.msra.mxu0 0.0
    %485 = vmatprep.subr.mxu0 0.0
    %486 = vmatpush1.msra.mxu0 0.0
    %487 = vmatprep.subr.mxu0 0.0
    %488 = vmatpush1.msra.mxu0 0.0
    %489 = vmatprep.subr.mxu0 0.0
    %490 = vmatpush1.msra.mxu0 0.0
    %491 = vmatprep.mubr.f32.mxu0 0.0
    %492 = vmatmul.mubr.f32.gmra.mrb[0].mxu0 %v402
    %v493 = vpop.f32.mrb[0].mxu0
    %v494 = vadd.f32 %v425, %v493
    %v495 = vpop.f32.mrb[0].mxu0
    %496 = vmatprep.mubr.f32.mxu0 0.0
    %497 = vmatmul.mubr.f32.gmra.mrb[0].mxu0 %v403
    %v498 = vpop.f32.mrb[0].mxu0
    %v499 = vadd.f32 %v425, %v498
    %v500 = vpop.f32.mrb[0].mxu0
    %501 = vdwg.mxu0
    %v502 = vmul.f32 %v494, 0.01
    %v503 = vmul.f32 %v499, 0.01
    %v504 = vmax.f32 %v494, %v502
    %v505 = vmax.f32 %v499, %v503
    %506 = vst [vmem:[#allocation11] sm:$0xff] %v504
    %507 = vst [vmem:[#allocation11 + $0x8] sm:$0xff] %v505
    // Predicated region
    $region58: #{tpu_custom_call.1} parent=1 // pred_check
      _
    $region59: #{tpu_custom_call.1} parent=1 // pred_check_branch
      %509 = sbr.rel (0) target = $region61
    $region60: #{tpu_custom_call.1} parent=1 // pred_region
      %s511 = ssub.s32 256, 256
      %512 = vsyncadd [#allocation4], %s511
      %s513 = sshll.u32 [#allocation11], 4
      %s514 = int_to_ptr.vmem [resolvable:$true] %s513
      %519 = dma.vmem_to_hbm [thread:$0]  %s514, 256, %s9, [#allocation4], 128, 128, 8
    $region61: #{tpu_custom_call.1} parent=1 // pred_fallthru
      _
    // Predicated region
    $region62: #{tpu_custom_call.1} parent=1 // pred_check
      _
    $region63: #{tpu_custom_call.1} parent=1 // pred_check_branch
      %521 = sbr.rel (0) target = $region65
    $region64: #{tpu_custom_call.1} parent=1 // pred_region
      %522 = dma.done [#allocation4], 256
    $region65: #{tpu_custom_call.1} parent=1 // pred_fallthru
      _
    %523 = vsyncpa [#allocation3], 1
    %524 = vsyncpa [#allocation6], 1
    %525 = vsyncpa [#allocation9], 1
    %526 = vsyncpa [#allocation4], 1

</llo_original>
